<compile_context>
chip_gen: v6e
topology: v6e:2x2x1
jax: 0.10.0
libtpu: 0.0.40
codegen_flags: <defaults>
</compile_context>

<pallas_src>
import jax
import jax.numpy as jnp
from jax import lax
from jax.experimental import pallas as pl
from jax.experimental.pallas import tpu as pltpu


def _round_up(x, m):
    return ((x + m - 1) // m) * m


def _pick_vmem_limit():
    """Generation-aware scoped-VMEM cap (~96 MiB on v5e/v6e, ~48 MiB on v7x)."""
    try:
        phys = int(pltpu.get_tpu_info().vmem_capacity_bytes)
    except Exception:
        phys = 64 * 1024 * 1024          # conservative fallback (safe on v7x too)
    return int(min(phys * 3 // 4, 100 * 1024 * 1024))


def _choose_row_tile(Ho, Wo, W_ec, W_oc, C, Coutp, itemsize, vmem_limit):
    """Largest divisor T of Ho s.t. T output rows per step fit an MXU M-target
    (~<=2048 rows) and roughly a third of the VMEM budget (double-buffered I/O)."""
    row_in = 2 * (W_ec + W_oc) * C * itemsize        # 4 plane rows per output row
    row_tmp = Wo * 9 * C * itemsize                  # concat-K staging
    row_acc = Wo * Coutp * 4                         # f32 accumulator
    row_out = Wo * Coutp * itemsize
    per_row = 2 * (row_in + row_out) + row_tmp + row_acc
    t_vmem = max(1, (vmem_limit // 3) // max(per_row, 1))
    t_m = max(8, 2048 // max(Wo, 1))                 # keep M = T*Wo around <=2048
    t_cap = int(max(1, min(Ho, 32, t_vmem, t_m)))
    for t in range(t_cap, 0, -1):                    # exact grid, no ragged tiles
        if Ho % t == 0:
            return t
    return 1


# ----------------------------- Pallas kernel body -----------------------------

def _make_downsample_kernel(Wo, C, concat_k):
    def kernel(pe0_ref, pe0h_ref, pe1_ref, pe1h_ref, po0_ref, po1_ref,
               w_ref, b_ref, o_ref):
        T = o_ref.shape[1]
        Coutp = o_ref.shape[3]
        M = T * Wo

        pe0 = pe0_ref[0]          # even padded rows [tT, tT+T), even cols
        pe1 = pe1_ref[0]          # even padded rows,            odd  cols
        po0 = po0_ref[0]          # odd  padded rows,            even cols
        po1 = po1_ref[0]          # odd  padded rows,            odd  cols

        # kh = 2 uses even rows [tT+1, tT+T]: rows 1..T-1 of the resident block plus
        # the single-row halo block (even row (t+1)*T). No duplicated row DMAs.
        if T == 1:
            pe0n, pe1n = pe0h_ref[0], pe1h_ref[0]
        else:
            pe0n = jnp.concatenate([pe0[1:], pe0h_ref[0]], axis=0)
            pe1n = jnp.concatenate([pe1[1:], pe1h_ref[0]], axis=0)

        # Tap k = kh*3 + kw; tap_k[r, wo, :] = x_pad[2*(tT+r)+kh, 2*wo+kw, :].
        # The +1 column offsets are sublane shifts of rows that are already loaded.
        taps = (
            pe0[:, 0:Wo], pe1[:, 0:Wo], pe0[:, 1:Wo + 1],
            po0[:, 0:Wo], po1[:, 0:Wo], po0[:, 1:Wo + 1],
            pe0n[:, 0:Wo], pe1n[:, 0:Wo], pe0n[:, 1:Wo + 1],
        )

        if concat_k:
            # Lane-aligned (C % 128 == 0) channel concat -> one deep-K MXU matmul.
            x9 = jnp.concatenate(taps, axis=-1).reshape(M, 9 * C)
            acc = jnp.dot(x9, w_ref[...], preferred_element_type=jnp.float32)
        else:
            acc = jnp.zeros((M, Coutp), jnp.float32)
            for k, tap in enumerate(taps):        # static unroll: 9 MXU matmuls
                acc = acc + jnp.dot(tap.reshape(M, C),
                                    w_ref[k * C:(k + 1) * C, :],
                                    preferred_element_type=jnp.float32)

        out = acc + b_ref[...]                    # f32 bias, broadcast over M
        o_ref[0] = out.reshape(T, Wo, Coutp).astype(o_ref.dtype)

    return kernel


# ------------------------------- pallas_call wrapper --------------------------

def _pallas_downsample_conv(pe0, pe0h, pe1, pe1h, po0, po1, w_flat, b_row,
                            Ho, Wo, T, out_dtype, vmem_limit):
    N, _, W_ec, C = pe0.shape
    W_oc = pe1.shape[2]
    Coutp = w_flat.shape[-1]
    grid = (N, Ho // T)
    concat_k = (C % 128 == 0)
    kernel = _make_downsample_kernel(Wo, C, concat_k)

    def tile_spec(width, rows):
        # rows=T main block at row offset t*T; rows=1 halo block at row t.
        return pl.BlockSpec((1, rows, width, C), lambda n, t: (n, t, 0, 0))

    # Weights/bias have a constant block index -> fetched once, never re-DMAed.
    # Single-buffer them when large so the (9C, Coutp) tile doesn't eat a second
    # VMEM buffer (matters on v7x's 64 MiB VMEM at large C).
    in_itemsize = jnp.dtype(pe0.dtype).itemsize
    param_kwargs = {}
    if w_flat.size * in_itemsize > (4 << 20):
        param_kwargs = dict(pipeline_mode=pl.Buffered(1))
    w_spec = pl.BlockSpec((9 * C, Coutp), lambda n, t: (0, 0), **param_kwargs)
    b_spec = pl.BlockSpec((1, Coutp), lambda n, t: (0, 0), **param_kwargs)

    out_itemsize = jnp.dtype(out_dtype).itemsize
    flops = 2 * N * Ho * Wo * 9 * C * Coutp
    bytes_accessed = (
        N * (Ho + Ho // T) * (W_ec + W_oc) * C * in_itemsize   # even planes + halos
        + N * Ho * (W_ec + W_oc) * C * in_itemsize             # odd planes
        + w_flat.size * in_itemsize + b_row.size * 4           # resident params
        + N * Ho * Wo * Coutp * out_itemsize)                  # output

    return pl.pallas_call(
        kernel,
        out_shape=jax.ShapeDtypeStruct((N, Ho, Wo, Coutp), out_dtype),
        grid=grid,
        in_specs=[
            tile_spec(W_ec, T),   # pe0 main: even rows [tT, tT+T), even cols
            tile_spec(W_ec, 1),   # pe0 halo: even row (t+1)*T,     even cols
            tile_spec(W_oc, T),   # pe1 main: even rows,            odd  cols
            tile_spec(W_oc, 1),   # pe1 halo
            tile_spec(W_ec, T),   # po0:      odd  rows,            even cols
            tile_spec(W_oc, T),   # po1:      odd  rows,            odd  cols
            w_spec,
            b_spec,
        ],
        out_specs=pl.BlockSpec((1, T, Wo, Coutp), lambda n, t: (n, t, 0, 0)),
        compiler_params=pltpu.CompilerParams(
            dimension_semantics=("parallel", "parallel"),      # megacore on v7x
            vmem_limit_bytes=vmem_limit,
        ),
        cost_estimate=pl.CostEstimate(
            flops=int(flops), transcendentals=0,
            bytes_accessed=int(bytes_accessed)),
    )(pe0, pe0h, pe1, pe1h, po0, po1, w_flat, b_row)


# ------------------------------- Downsample module ----------------------------

def prepare_downsample_params(weight, bias, compute_dtype=jnp.bfloat16):
    """One-time re-layout of PyTorch-style conv params for the kernel.

    weight (Cout, Cin, 3, 3) -> w_flat (9*Cin, Coutp), row k*Cin + ci, k = kh*3 + kw
    bias   (Cout,)           -> b_row  (1, Coutp) float32
    Cout is zero-padded to a multiple of 128 for a lane-dense output/store path.
    """
    cout, cin = weight.shape[0], weight.shape[1]
    coutp = _round_up(cout, 128)
    w_flat = jnp.transpose(weight, (2, 3, 1, 0)).reshape(9 * cin, cout)
    w_flat = jnp.pad(w_flat, ((0, 0), (0, coutp - cout))).astype(compute_dtype)
    b_row = jnp.pad(bias.astype(jnp.float32), (0, coutp - cout)).reshape(1, coutp)
    return {"w_flat": w_flat, "b_row": b_row}


def downsample_init(channels, key, dtype=jnp.float32, compute_dtype=jnp.bfloat16):
    """nn.Conv2d-style uniform fan-in init, plus kernel-ready param re-layouts."""
    kw_, kb_ = jax.random.split(key)
    fan_in = channels * 9
    bound = 1.0 / float(fan_in) ** 0.5
    weight = jax.random.uniform(kw_, (channels, channels, 3, 3), dtype,
                                minval=-bound, maxval=bound)
    bias = jax.random.uniform(kb_, (channels,), dtype, minval=-bound, maxval=bound)
    params = {"weight": weight, "bias": bias}
    params.update(prepare_downsample_params(weight, bias, compute_dtype))
    return params


def _xla_downsample(weight, bias, x):
    """Reference / small-channel fallback: reflection pad + strided conv via XLA."""
    x_pad = jnp.pad(x, ((0, 0), (0, 0), (1, 1), (1, 1)), mode="reflect")
    y = lax.conv_general_dilated(
        x_pad, weight, window_strides=(2, 2), padding="VALID",
        dimension_numbers=("NCHW", "OIHW", "NCHW"))
    return y + bias.reshape(1, -1, 1, 1)


def downsample_forward(params, x, compute_dtype=jnp.bfloat16, nhwc_output=False,
                       use_pallas=None):
    """x: (N, C, H, W) -> (N, C, Ho, Wo) with Ho = floor((H-1)/2)+1.

    Equivalent to ReflectionPad2d(1) followed by Conv2d(C, C, 3, stride=2).
    """
    N, C, H, W = x.shape
    if use_pallas is None:
        use_pallas = C >= 64   # lane padding Cout->128 is wasteful for tiny C
    if not use_pallas:
        out = _xla_downsample(params["weight"], params["bias"], x)
        return jnp.transpose(out, (0, 2, 3, 1)) if nhwc_output else out

    w_flat, b_row = params.get("w_flat"), params.get("b_row")
    if w_flat is None or w_flat.dtype != jnp.dtype(compute_dtype):
        prep = prepare_downsample_params(params["weight"], params["bias"],
                                         compute_dtype)
        w_flat, b_row = prep["w_flat"], prep["b_row"]
    Coutp = w_flat.shape[-1]

    Hp, Wp = H + 2, W + 2
    Ho = (Hp - 3) // 2 + 1
    Wo = (Wp - 3) // 2 + 1

    # Layout glue only (single HBM pass, no 9x im2col): NCHW->NHWC, reflection pad,
    # compute-dtype cast, stride-2 parity decomposition.
    x_nhwc = jnp.transpose(x, (0, 2, 3, 1))
    x_pad = jnp.pad(x_nhwc, ((0, 0), (1, 1), (1, 1), (0, 0)),
                    mode="reflect").astype(compute_dtype)
    pe0 = x_pad[:, 0::2, 0::2, :]   # even rows, even cols (rows 0..Ho are used)
    pe1 = x_pad[:, 0::2, 1::2, :]   # even rows, odd  cols
    po0 = x_pad[:, 1::2, 0::2, :]   # odd  rows, even cols
    po1 = x_pad[:, 1::2, 1::2, :]   # odd  rows, odd  cols

    out_dtype = jnp.dtype(compute_dtype)
    vmem_limit = _pick_vmem_limit()
    T = _choose_row_tile(Ho, Wo, pe0.shape[2], pe1.shape[2], C, Coutp,
                         out_dtype.itemsize, vmem_limit)

    # Per-tile single-row halos of the even planes (even row (t+1)*T): replaces the
    # duplicated even-plane DMAs -> read amplification is (T+1)/T instead of ~1.5x.
    pe0h = pe0[:, T::T][:, :Ho // T]
    pe1h = pe1[:, T::T][:, :Ho // T]

    out_p = _pallas_downsample_conv(pe0, pe0h, pe1, pe1h, po0, po1,
                                    w_flat, b_row, Ho, Wo, T, out_dtype, vmem_limit)
    out = out_p[..., :C]                                  # drop Cout lane padding
    if nhwc_output:
        return out.astype(x.dtype)
    # Single fused epilogue pass (slice + transpose + cast), done in compute dtype.
    return jnp.transpose(out, (0, 3, 1, 2)).astype(x.dtype)


# ------------------------------------ main -------------------------------------

if __name__ == "__main__":
    key = jax.random.PRNGKey(0)
    kx, kp, kx2, kp2 = jax.random.split(key, 4)

    fwd = jax.jit(downsample_forward,
                  static_argnames=("compute_dtype", "nhwc_output", "use_pallas"))

    # --- module-spec demo shape: N=2, C=4, H=W=16 (forces the Pallas path) ------
    N, C, H, W = 2, 4, 16, 16
    x = jax.random.normal(kx, (N, C, H, W), dtype=jnp.float32)
    params = downsample_init(C, kp)

    out_bf16 = jax.block_until_ready(fwd(params, x, use_pallas=True))
    out_f32 = jax.block_until_ready(
        fwd(params, x, compute_dtype=jnp.float32, use_pallas=True))
    ref = jax.block_until_ready(_xla_downsample(params["weight"], params["bias"], x))

    assert out_bf16.shape == (N, C, 8, 8), out_bf16.shape
    assert out_f32.shape == (N, C, 8, 8), out_f32.shape
    assert out_bf16.dtype == x.dtype and out_f32.dtype == x.dtype
    err_bf16 = float(jnp.max(jnp.abs(out_bf16.astype(jnp.float32) - ref)))
    err_f32 = float(jnp.max(jnp.abs(out_f32 - ref)))
    assert err_bf16 < 5e-2, err_bf16   # bf16 activations/weights/output, f32 accum
    assert err_f32 < 1e-4, err_f32     # true f32 path: tight tolerance

    # --- lane-aligned channel count: exercises the concat-K (single deep-K matmul)
    #     path, odd spatial extent, and the auto C>=64 Pallas dispatch --------------
    N2, C2, H2, W2 = 1, 128, 12, 16
    x2 = jax.random.normal(kx2, (N2, C2, H2, W2), dtype=jnp.float32)
    params2 = downsample_init(C2, kp2)
    out2 = jax.block_until_ready(fwd(params2, x2))
    ref2 = jax.block_until_ready(
        _xla_downsample(params2["weight"], params2["bias"], x2))
    assert out2.shape == ref2.shape == (N2, C2, 6, 8), out2.shape
    err2 = float(jnp.max(jnp.abs(out2.astype(jnp.float32) - ref2)))
    assert err2 < 5e-2, err2

    print("KERNEL_OK")
</pallas_src>

<mosaic_0001>
module attributes {stable_mosaic.version = 11 : i64} {
  func.func @kernel(%arg0: i32, %arg1: i32, %arg2: memref<1x8x9x4xbf16, #tpu.memory_space<vmem>>, %arg3: memref<1x1x9x4xbf16, #tpu.memory_space<vmem>>, %arg4: memref<1x8x9x4xbf16, #tpu.memory_space<vmem>>, %arg5: memref<1x1x9x4xbf16, #tpu.memory_space<vmem>>, %arg6: memref<1x8x9x4xbf16, #tpu.memory_space<vmem>>, %arg7: memref<1x8x9x4xbf16, #tpu.memory_space<vmem>>, %arg8: memref<36x128xbf16, #tpu.memory_space<vmem>>, %arg9: memref<1x128xf32, #tpu.memory_space<vmem>>, %arg10: memref<1x8x8x128xbf16, #tpu.memory_space<vmem>>) attributes {dimension_semantics = [#tpu.dimension_semantics<parallel>, #tpu.dimension_semantics<parallel>], iteration_bounds = array<i64: 2, 1>, scalar_prefetch = 0 : i64, scratch_operands = 0 : i64, tpu.core_type = #tpu.core_type<tc>, window_params = [{transform_indices = @transform_0, window_bounds = array<i64: 1, 8, 9, 4>}, {transform_indices = @transform_1, window_bounds = array<i64: 1, 1, 9, 4>}, {transform_indices = @transform_2, window_bounds = array<i64: 1, 8, 9, 4>}, {transform_indices = @transform_3, window_bounds = array<i64: 1, 1, 9, 4>}, {transform_indices = @transform_4, window_bounds = array<i64: 1, 8, 9, 4>}, {transform_indices = @transform_5, window_bounds = array<i64: 1, 8, 9, 4>}, {pipeline_mode = #tpu.pipeline_mode<synchronous>, transform_indices = @transform_6, window_bounds = array<i64: 36, 128>}, {pipeline_mode = #tpu.pipeline_mode<synchronous>, transform_indices = @transform_7, window_bounds = array<i64: 1, 128>}, {transform_indices = @transform_8, window_bounds = array<i64: 1, 8, 8, 128>}]} {
    %c0 = arith.constant 0 : index
    %c0_0 = arith.constant 0 : index
    %c0_1 = arith.constant 0 : index
    %c0_2 = arith.constant 0 : index
    %0 = vector.load %arg2[%c0, %c0_0, %c0_1, %c0_2] : memref<1x8x9x4xbf16, #tpu.memory_space<vmem>>, vector<1x8x9x4xbf16>
    %1 = vector.shape_cast %0 : vector<1x8x9x4xbf16> to vector<8x9x4xbf16>
    %c0_3 = arith.constant 0 : index
    %c0_4 = arith.constant 0 : index
    %c0_5 = arith.constant 0 : index
    %c0_6 = arith.constant 0 : index
    %2 = vector.load %arg4[%c0_3, %c0_4, %c0_5, %c0_6] : memref<1x8x9x4xbf16, #tpu.memory_space<vmem>>, vector<1x8x9x4xbf16>
    %3 = vector.shape_cast %2 : vector<1x8x9x4xbf16> to vector<8x9x4xbf16>
    %c0_7 = arith.constant 0 : index
    %c0_8 = arith.constant 0 : index
    %c0_9 = arith.constant 0 : index
    %c0_10 = arith.constant 0 : index
    %4 = vector.load %arg6[%c0_7, %c0_8, %c0_9, %c0_10] : memref<1x8x9x4xbf16, #tpu.memory_space<vmem>>, vector<1x8x9x4xbf16>
    %5 = vector.shape_cast %4 : vector<1x8x9x4xbf16> to vector<8x9x4xbf16>
    %c0_11 = arith.constant 0 : index
    %c0_12 = arith.constant 0 : index
    %c0_13 = arith.constant 0 : index
    %c0_14 = arith.constant 0 : index
    %6 = vector.load %arg7[%c0_11, %c0_12, %c0_13, %c0_14] : memref<1x8x9x4xbf16, #tpu.memory_space<vmem>>, vector<1x8x9x4xbf16>
    %7 = vector.shape_cast %6 : vector<1x8x9x4xbf16> to vector<8x9x4xbf16>
    %8 = vector.extract_strided_slice %1 {offsets = [1, 0, 0], sizes = [7, 9, 4], strides = [1, 1, 1]} : vector<8x9x4xbf16> to vector<7x9x4xbf16>
    %c0_15 = arith.constant 0 : index
    %c0_16 = arith.constant 0 : index
    %c0_17 = arith.constant 0 : index
    %c0_18 = arith.constant 0 : index
    %9 = vector.load %arg3[%c0_15, %c0_16, %c0_17, %c0_18] : memref<1x1x9x4xbf16, #tpu.memory_space<vmem>>, vector<1x1x9x4xbf16>
    %10 = vector.shape_cast %9 : vector<1x1x9x4xbf16> to vector<1x9x4xbf16>
    %11 = tpu.concatenate %8, %10 in 0 : vector<7x9x4xbf16>, vector<1x9x4xbf16> -> vector<8x9x4xbf16>
    %12 = vector.extract_strided_slice %3 {offsets = [1, 0, 0], sizes = [7, 9, 4], strides = [1, 1, 1]} : vector<8x9x4xbf16> to vector<7x9x4xbf16>
    %c0_19 = arith.constant 0 : index
    %c0_20 = arith.constant 0 : index
    %c0_21 = arith.constant 0 : index
    %c0_22 = arith.constant 0 : index
    %13 = vector.load %arg5[%c0_19, %c0_20, %c0_21, %c0_22] : memref<1x1x9x4xbf16, #tpu.memory_space<vmem>>, vector<1x1x9x4xbf16>
    %14 = vector.shape_cast %13 : vector<1x1x9x4xbf16> to vector<1x9x4xbf16>
    %15 = tpu.concatenate %12, %14 in 0 : vector<7x9x4xbf16>, vector<1x9x4xbf16> -> vector<8x9x4xbf16>
    %16 = vector.extract_strided_slice %1 {offsets = [0, 0, 0], sizes = [8, 8, 4], strides = [1, 1, 1]} : vector<8x9x4xbf16> to vector<8x8x4xbf16>
    %17 = vector.extract_strided_slice %3 {offsets = [0, 0, 0], sizes = [8, 8, 4], strides = [1, 1, 1]} : vector<8x9x4xbf16> to vector<8x8x4xbf16>
    %18 = vector.extract_strided_slice %1 {offsets = [0, 1, 0], sizes = [8, 8, 4], strides = [1, 1, 1]} : vector<8x9x4xbf16> to vector<8x8x4xbf16>
    %19 = vector.extract_strided_slice %5 {offsets = [0, 0, 0], sizes = [8, 8, 4], strides = [1, 1, 1]} : vector<8x9x4xbf16> to vector<8x8x4xbf16>
    %20 = vector.extract_strided_slice %7 {offsets = [0, 0, 0], sizes = [8, 8, 4], strides = [1, 1, 1]} : vector<8x9x4xbf16> to vector<8x8x4xbf16>
    %21 = vector.extract_strided_slice %5 {offsets = [0, 1, 0], sizes = [8, 8, 4], strides = [1, 1, 1]} : vector<8x9x4xbf16> to vector<8x8x4xbf16>
    %22 = vector.extract_strided_slice %11 {offsets = [0, 0, 0], sizes = [8, 8, 4], strides = [1, 1, 1]} : vector<8x9x4xbf16> to vector<8x8x4xbf16>
    %23 = vector.extract_strided_slice %15 {offsets = [0, 0, 0], sizes = [8, 8, 4], strides = [1, 1, 1]} : vector<8x9x4xbf16> to vector<8x8x4xbf16>
    %24 = vector.extract_strided_slice %11 {offsets = [0, 1, 0], sizes = [8, 8, 4], strides = [1, 1, 1]} : vector<8x9x4xbf16> to vector<8x8x4xbf16>
    %cst = arith.constant 0.000000e+00 : f32
    %25 = vector.broadcast %cst : f32 to vector<64x128xf32>
    %26 = vector.shape_cast %16 : vector<8x8x4xbf16> to vector<64x4xbf16>
    %c0_23 = arith.constant 0 : index
    %c0_24 = arith.constant 0 : index
    %27 = vector.load %arg8[%c0_23, %c0_24] : memref<36x128xbf16, #tpu.memory_space<vmem>>, vector<4x128xbf16>
    %cst_25 = arith.constant dense<0.000000e+00> : vector<64x128xf32>
    %28 = tpu.matmul %26, %27, %cst_25 {dimension_numbers = #tpu.dot_dimension_numbers<[1], [0], [0], [1], [0, 0, 1, 1], [], []>} : vector<64x4xbf16>, vector<4x128xbf16>, vector<64x128xf32> -> vector<64x128xf32>
    %29 = arith.addf %25, %28 : vector<64x128xf32>
    %30 = vector.shape_cast %17 : vector<8x8x4xbf16> to vector<64x4xbf16>
    %c4 = arith.constant 4 : index
    %c0_26 = arith.constant 0 : index
    %31 = vector.load %arg8[%c4, %c0_26] : memref<36x128xbf16, #tpu.memory_space<vmem>>, vector<4x128xbf16>
    %cst_27 = arith.constant dense<0.000000e+00> : vector<64x128xf32>
    %32 = tpu.matmul %30, %31, %cst_27 {dimension_numbers = #tpu.dot_dimension_numbers<[1], [0], [0], [1], [0, 0, 1, 1], [], []>} : vector<64x4xbf16>, vector<4x128xbf16>, vector<64x128xf32> -> vector<64x128xf32>
    %33 = arith.addf %29, %32 : vector<64x128xf32>
    %34 = vector.shape_cast %18 : vector<8x8x4xbf16> to vector<64x4xbf16>
    %c8 = arith.constant 8 : index
    %c0_28 = arith.constant 0 : index
    %35 = vector.load %arg8[%c8, %c0_28] : memref<36x128xbf16, #tpu.memory_space<vmem>>, vector<4x128xbf16>
    %cst_29 = arith.constant dense<0.000000e+00> : vector<64x128xf32>
    %36 = tpu.matmul %34, %35, %cst_29 {dimension_numbers = #tpu.dot_dimension_numbers<[1], [0], [0], [1], [0, 0, 1, 1], [], []>} : vector<64x4xbf16>, vector<4x128xbf16>, vector<64x128xf32> -> vector<64x128xf32>
    %37 = arith.addf %33, %36 : vector<64x128xf32>
    %38 = vector.shape_cast %19 : vector<8x8x4xbf16> to vector<64x4xbf16>
    %c12 = arith.constant 12 : index
    %c0_30 = arith.constant 0 : index
    %39 = vector.load %arg8[%c12, %c0_30] : memref<36x128xbf16, #tpu.memory_space<vmem>>, vector<4x128xbf16>
    %cst_31 = arith.constant dense<0.000000e+00> : vector<64x128xf32>
    %40 = tpu.matmul %38, %39, %cst_31 {dimension_numbers = #tpu.dot_dimension_numbers<[1], [0], [0], [1], [0, 0, 1, 1], [], []>} : vector<64x4xbf16>, vector<4x128xbf16>, vector<64x128xf32> -> vector<64x128xf32>
    %41 = arith.addf %37, %40 : vector<64x128xf32>
    %42 = vector.shape_cast %20 : vector<8x8x4xbf16> to vector<64x4xbf16>
    %c16 = arith.constant 16 : index
    %c0_32 = arith.constant 0 : index
    %43 = vector.load %arg8[%c16, %c0_32] : memref<36x128xbf16, #tpu.memory_space<vmem>>, vector<4x128xbf16>
    %cst_33 = arith.constant dense<0.000000e+00> : vector<64x128xf32>
    %44 = tpu.matmul %42, %43, %cst_33 {dimension_numbers = #tpu.dot_dimension_numbers<[1], [0], [0], [1], [0, 0, 1, 1], [], []>} : vector<64x4xbf16>, vector<4x128xbf16>, vector<64x128xf32> -> vector<64x128xf32>
    %45 = arith.addf %41, %44 : vector<64x128xf32>
    %46 = vector.shape_cast %21 : vector<8x8x4xbf16> to vector<64x4xbf16>
    %c20 = arith.constant 20 : index
    %c0_34 = arith.constant 0 : index
    %47 = vector.load %arg8[%c20, %c0_34] : memref<36x128xbf16, #tpu.memory_space<vmem>>, vector<4x128xbf16>
    %cst_35 = arith.constant dense<0.000000e+00> : vector<64x128xf32>
    %48 = tpu.matmul %46, %47, %cst_35 {dimension_numbers = #tpu.dot_dimension_numbers<[1], [0], [0], [1], [0, 0, 1, 1], [], []>} : vector<64x4xbf16>, vector<4x128xbf16>, vector<64x128xf32> -> vector<64x128xf32>
    %49 = arith.addf %45, %48 : vector<64x128xf32>
    %50 = vector.shape_cast %22 : vector<8x8x4xbf16> to vector<64x4xbf16>
    %c24 = arith.constant 24 : index
    %c0_36 = arith.constant 0 : index
    %51 = vector.load %arg8[%c24, %c0_36] : memref<36x128xbf16, #tpu.memory_space<vmem>>, vector<4x128xbf16>
    %cst_37 = arith.constant dense<0.000000e+00> : vector<64x128xf32>
    %52 = tpu.matmul %50, %51, %cst_37 {dimension_numbers = #tpu.dot_dimension_numbers<[1], [0], [0], [1], [0, 0, 1, 1], [], []>} : vector<64x4xbf16>, vector<4x128xbf16>, vector<64x128xf32> -> vector<64x128xf32>
    %53 = arith.addf %49, %52 : vector<64x128xf32>
    %54 = vector.shape_cast %23 : vector<8x8x4xbf16> to vector<64x4xbf16>
    %c28 = arith.constant 28 : index
    %c0_38 = arith.constant 0 : index
    %55 = vector.load %arg8[%c28, %c0_38] : memref<36x128xbf16, #tpu.memory_space<vmem>>, vector<4x128xbf16>
    %cst_39 = arith.constant dense<0.000000e+00> : vector<64x128xf32>
    %56 = tpu.matmul %54, %55, %cst_39 {dimension_numbers = #tpu.dot_dimension_numbers<[1], [0], [0], [1], [0, 0, 1, 1], [], []>} : vector<64x4xbf16>, vector<4x128xbf16>, vector<64x128xf32> -> vector<64x128xf32>
    %57 = arith.addf %53, %56 : vector<64x128xf32>
    %58 = vector.shape_cast %24 : vector<8x8x4xbf16> to vector<64x4xbf16>
    %c32 = arith.constant 32 : index
    %c0_40 = arith.constant 0 : index
    %59 = vector.load %arg8[%c32, %c0_40] : memref<36x128xbf16, #tpu.memory_space<vmem>>, vector<4x128xbf16>
    %cst_41 = arith.constant dense<0.000000e+00> : vector<64x128xf32>
    %60 = tpu.matmul %58, %59, %cst_41 {dimension_numbers = #tpu.dot_dimension_numbers<[1], [0], [0], [1], [0, 0, 1, 1], [], []>} : vector<64x4xbf16>, vector<4x128xbf16>, vector<64x128xf32> -> vector<64x128xf32>
    %61 = arith.addf %57, %60 : vector<64x128xf32>
    %c0_42 = arith.constant 0 : index
    %c0_43 = arith.constant 0 : index
    %62 = vector.load %arg9[%c0_42, %c0_43] : memref<1x128xf32, #tpu.memory_space<vmem>>, vector<1x128xf32>
    %63 = vector.broadcast %62 : vector<1x128xf32> to vector<64x128xf32>
    %64 = arith.addf %61, %63 : vector<64x128xf32>
    %65 = vector.shape_cast %64 : vector<64x128xf32> to vector<8x8x128xf32>
    %66 = arith.truncf %65 : vector<8x8x128xf32> to vector<8x8x128xbf16>
    %c0_44 = arith.constant 0 : index
    %c0_45 = arith.constant 0 : index
    %c0_46 = arith.constant 0 : index
    %c0_47 = arith.constant 0 : index
    %67 = vector.load %arg10[%c0_44, %c0_45, %c0_46, %c0_47] : memref<1x8x8x128xbf16, #tpu.memory_space<vmem>>, vector<1x8x8x128xbf16>
    %68 = vector.shape_cast %67 : vector<1x8x8x128xbf16> to vector<8x8x128xbf16>
    %69 = vector.shape_cast %66 : vector<8x8x128xbf16> to vector<1x8x8x128xbf16>
    tpu.vector_store %arg10[%c0_44, %c0_45, %c0_46, %c0_47], %69 {strides = array<i32>} : memref<1x8x8x128xbf16, #tpu.memory_space<vmem>>, vector<1x8x8x128xbf16>,
    return
  }
  func.func @transform_0(%arg0: i32, %arg1: i32) -> (i32, i32, i32, i32) {
    %c0_i32 = arith.constant 0 : i32
    %c0_i32_0 = arith.constant 0 : i32
    %c0_i32_1 = arith.constant 0 : i32
    return %arg0, %arg1, %c0_i32, %c0_i32_0 : i32, i32, i32, i32
  }
  func.func @transform_1(%arg0: i32, %arg1: i32) -> (i32, i32, i32, i32) {
    %c0_i32 = arith.constant 0 : i32
    %c0_i32_0 = arith.constant 0 : i32
    %c0_i32_1 = arith.constant 0 : i32
    return %arg0, %arg1, %c0_i32, %c0_i32_0 : i32, i32, i32, i32
  }
  func.func @transform_2(%arg0: i32, %arg1: i32) -> (i32, i32, i32, i32) {
    %c0_i32 = arith.constant 0 : i32
    %c0_i32_0 = arith.constant 0 : i32
    %c0_i32_1 = arith.constant 0 : i32
    return %arg0, %arg1, %c0_i32, %c0_i32_0 : i32, i32, i32, i32
  }
  func.func @transform_3(%arg0: i32, %arg1: i32) -> (i32, i32, i32, i32) {
    %c0_i32 = arith.constant 0 : i32
    %c0_i32_0 = arith.constant 0 : i32
    %c0_i32_1 = arith.constant 0 : i32
    return %arg0, %arg1, %c0_i32, %c0_i32_0 : i32, i32, i32, i32
  }
  func.func @transform_4(%arg0: i32, %arg1: i32) -> (i32, i32, i32, i32) {
    %c0_i32 = arith.constant 0 : i32
    %c0_i32_0 = arith.constant 0 : i32
    %c0_i32_1 = arith.constant 0 : i32
    return %arg0, %arg1, %c0_i32, %c0_i32_0 : i32, i32, i32, i32
  }
  func.func @transform_5(%arg0: i32, %arg1: i32) -> (i32, i32, i32, i32) {
    %c0_i32 = arith.constant 0 : i32
    %c0_i32_0 = arith.constant 0 : i32
    %c0_i32_1 = arith.constant 0 : i32
    return %arg0, %arg1, %c0_i32, %c0_i32_0 : i32, i32, i32, i32
  }
  func.func @transform_6(%arg0: i32, %arg1: i32) -> (i32, i32) {
    %c0_i32 = arith.constant 0 : i32
    %c0_i32_0 = arith.constant 0 : i32
    %c0_i32_1 = arith.constant 0 : i32
    return %c0_i32, %c0_i32_0 : i32, i32
  }
  func.func @transform_7(%arg0: i32, %arg1: i32) -> (i32, i32) {
    %c0_i32 = arith.constant 0 : i32
    %c0_i32_0 = arith.constant 0 : i32
    %c0_i32_1 = arith.constant 0 : i32
    return %c0_i32, %c0_i32_0 : i32, i32
  }
  func.func @transform_8(%arg0: i32, %arg1: i32) -> (i32, i32, i32, i32) {
    %c0_i32 = arith.constant 0 : i32
    %c0_i32_0 = arith.constant 0 : i32
    %c0_i32_1 = arith.constant 0 : i32
    return %arg0, %arg1, %c0_i32, %c0_i32_0 : i32, i32, i32, i32
  }
}

</mosaic_0001>

<llo_original>
// kernel: downsample_forward.1
$region0: #{downsample_forward.1}
  #allocation0 [shape = 'u32[]', space=smem, size = 0x4, offset = 0x4, fixed_abs, tag = 'smem constant byte address 0x4 - core index']
  #allocation1 [shape = 'u32[144,128]{1,0:T(1,128)}', space=vmem, size = 0x12000, scoped, tag = 'internal scratch']
  %s0 = inlined_call_operand.vmem [shape: bf16[2,9,9,4], index: 0, kind: input, shape index: {}]
  %s1 = inlined_call_operand.vmem [shape: bf16[2,1,9,4], index: 1, kind: input, shape index: {}]
  %s2 = inlined_call_operand.vmem [shape: bf16[2,9,9,4], index: 2, kind: input, shape index: {}]
  %s3 = inlined_call_operand.vmem [shape: bf16[2,1,9,4], index: 3, kind: input, shape index: {}]
  %s4 = inlined_call_operand.vmem [shape: bf16[2,9,9,4], index: 4, kind: input, shape index: {}]
  %s5 = inlined_call_operand.vmem [shape: bf16[2,9,9,4], index: 5, kind: input, shape index: {}]
  %s6 = inlined_call_operand.vmem [shape: bf16[36,128], index: 6, kind: input, shape index: {}]
  %s7 = inlined_call_operand.vmem [shape: f32[1,128], index: 7, kind: input, shape index: {}]
  %s8 = inlined_call_operand.vmem [shape: bf16[2,8,8,128], index: 8, kind: output, shape index: {}]
  %s9 = sld [smem:[#allocation0]]
  $region65: #{downsample_forward.1} parent=0
    _
  %s11 = ssub.s32 1, %s9
  %s12 = scalar_select 0, %s11, %s9
  loop: start=0, step=1, limit=4
  $region2: #{downsample_forward.1} parent=0 // loop_pre_header
    _
  $region3: #{downsample_forward.1} parent=0 // loop_header
    %s14 = sphi 0, %s18
    %p15 = scmp.ge.s32.totalorder %s14, 4
    %s21 = sphi 0, %s33
    %s22 = sphi 0, %s29
    %s23 = sphi 0, %s21
    %s24 = sphi 0, %s22
    %s25 = sphi 0, %s23
    %s26 = sphi 0, %s24
    %s38 = sphi 0, %s40
    %s41 = sphi 0, %s38
    %s42 = sphi 0, %s41
    %s58 = sphi 0, %s42
    %s66 = sphi 0, %s68
    %s69 = sphi 0, %s66
    %s70 = sphi 0, %s69
    %s86 = sphi 0, %s70
    %s94 = sphi 0, %s96
    %s97 = sphi 0, %s94
    %s98 = sphi 0, %s97
    %s114 = sphi 0, %s98
    %s122 = sphi 0, %s124
    %s125 = sphi 0, %s122
    %s126 = sphi 0, %s125
    %s142 = sphi 0, %s126
    %s150 = sphi 0, %s152
    %s153 = sphi 0, %s150
    %s154 = sphi 0, %s153
    %s170 = sphi 0, %s154
    %s178 = sphi 0, %s180
    %s181 = sphi 0, %s178
    %s182 = sphi 0, %s181
    %s198 = sphi 0, %s182
    %s202 = sphi 0, %s202
    %s204 = sphi 0, %s202
    %s205 = sphi 0, %s204
    %s219 = sphi 0, %s205
    %s223 = sphi 0, %s223
    %s225 = sphi 0, %s223
    %s226 = sphi 0, %s225
    %s240 = sphi 0, %s226
    %s248 = sphi 0, %s250
    %s251 = sphi 0, %s248
    %s252 = sphi 0, %s251
    %s268 = sphi 0, %s252
  $region4: #{downsample_forward.1} parent=0 // loop_header_branch
    %17 = sbr.rel (%p15) target = $region8
  $region5: #{downsample_forward.1} parent=0 // loop_body
    %s19 = ssub.s32 %s14, 1
    %s20 = ssub.s32 %s14, 2
    %s27 = sadd.s32 1, %s22
    %p28 = scmp.ge.s32.totalorder %s27, 1
    %s29 = scalar_select %p28, 0, %s27
    %s30 = sadd.s32 1, %s21
    %s31 = scalar_select %p28, %s30, %s21
    %p32 = scmp.ge.s32.totalorder %s31, 2
    %s33 = scalar_select %p32, 0, %s31
    %s34 = ssub.s32 %s21, %s33
    %s35 = ssub.s32 %s22, %s29
    %s36 = sor.u32 %s34, %s35
    %p37 = scmp.eq.s32.totalorder %s36, 0
    %s39 = sadd.s32 %s38, 1
    %s40 = scalar_select %p37, %s38, %s39
    %p43 = pneg %p37
    %p44 = scmp.eq.s32.totalorder %s14, 1
    %p45 = por %p43, %p44
    %p46 = scmp.ne.s32.totalorder %s38, %s41
    %p47 = scmp.eq.s32.totalorder %s14, 0
    %p48 = por %p46, %p47
    %p49 = scmp.ne.s32.totalorder %s38, %s41
    %p50 = scmp.eq.s32.totalorder %s19, 1
    %p51 = por %p49, %p50
    %p52 = scmp.ne.s32.totalorder %s41, %s42
    %p53 = scmp.eq.s32.totalorder %s19, 0
    %p54 = por %p52, %p53
    %p55 = scmp.ne.s32.totalorder %s41, %s42
    %p56 = scmp.eq.s32.totalorder %s20, 1
    %p57 = por %p55, %p56
    %p59 = scmp.ne.s32.totalorder %s42, %s58
    %p60 = scmp.eq.s32.totalorder %s20, 0
    %p61 = por %p59, %p60
    %s62 = ssub.s32 %s21, %s33
    %s63 = ssub.s32 %s22, %s29
    %s64 = sor.u32 %s62, %s63
    %p65 = scmp.eq.s32.totalorder %s64, 0
    %s67 = sadd.s32 %s66, 1
    %s68 = scalar_select %p65, %s66, %s67
    %p71 = pneg %p65
    %p72 = scmp.eq.s32.totalorder %s14, 1
    %p73 = por %p71, %p72
    %p74 = scmp.ne.s32.totalorder %s66, %s69
    %p75 = scmp.eq.s32.totalorder %s14, 0
    %p76 = por %p74, %p75
    %p77 = scmp.ne.s32.totalorder %s66, %s69
    %p78 = scmp.eq.s32.totalorder %s19, 1
    %p79 = por %p77, %p78
    %p80 = scmp.ne.s32.totalorder %s69, %s70
    %p81 = scmp.eq.s32.totalorder %s19, 0
    %p82 = por %p80, %p81
    %p83 = scmp.ne.s32.totalorder %s69, %s70
    %p84 = scmp.eq.s32.totalorder %s20, 1
    %p85 = por %p83, %p84
    %p87 = scmp.ne.s32.totalorder %s70, %s86
    %p88 = scmp.eq.s32.totalorder %s20, 0
    %p89 = por %p87, %p88
    %s90 = ssub.s32 %s21, %s33
    %s91 = ssub.s32 %s22, %s29
    %s92 = sor.u32 %s90, %s91
    %p93 = scmp.eq.s32.totalorder %s92, 0
    %s95 = sadd.s32 %s94, 1
    %s96 = scalar_select %p93, %s94, %s95
    %p99 = pneg %p93
    %p100 = scmp.eq.s32.totalorder %s14, 1
    %p101 = por %p99, %p100
    %p102 = scmp.ne.s32.totalorder %s94, %s97
    %p103 = scmp.eq.s32.totalorder %s14, 0
    %p104 = por %p102, %p103
    %p105 = scmp.ne.s32.totalorder %s94, %s97
    %p106 = scmp.eq.s32.totalorder %s19, 1
    %p107 = por %p105, %p106
    %p108 = scmp.ne.s32.totalorder %s97, %s98
    %p109 = scmp.eq.s32.totalorder %s19, 0
    %p110 = por %p108, %p109
    %p111 = scmp.ne.s32.totalorder %s97, %s98
    %p112 = scmp.eq.s32.totalorder %s20, 1
    %p113 = por %p111, %p112
    %p115 = scmp.ne.s32.totalorder %s98, %s114
    %p116 = scmp.eq.s32.totalorder %s20, 0
    %p117 = por %p115, %p116
    %s118 = ssub.s32 %s21, %s33
    %s119 = ssub.s32 %s22, %s29
    %s120 = sor.u32 %s118, %s119
    %p121 = scmp.eq.s32.totalorder %s120, 0
    %s123 = sadd.s32 %s122, 1
    %s124 = scalar_select %p121, %s122, %s123
    %p127 = pneg %p121
    %p128 = scmp.eq.s32.totalorder %s14, 1
    %p129 = por %p127, %p128
    %p130 = scmp.ne.s32.totalorder %s122, %s125
    %p131 = scmp.eq.s32.totalorder %s14, 0
    %p132 = por %p130, %p131
    %p133 = scmp.ne.s32.totalorder %s122, %s125
    %p134 = scmp.eq.s32.totalorder %s19, 1
    %p135 = por %p133, %p134
    %p136 = scmp.ne.s32.totalorder %s125, %s126
    %p137 = scmp.eq.s32.totalorder %s19, 0
    %p138 = por %p136, %p137
    %p139 = scmp.ne.s32.totalorder %s125, %s126
    %p140 = scmp.eq.s32.totalorder %s20, 1
    %p141 = por %p139, %p140
    %p143 = scmp.ne.s32.totalorder %s126, %s142
    %p144 = scmp.eq.s32.totalorder %s20, 0
    %p145 = por %p143, %p144
    %s146 = ssub.s32 %s21, %s33
    %s147 = ssub.s32 %s22, %s29
    %s148 = sor.u32 %s146, %s147
    %p149 = scmp.eq.s32.totalorder %s148, 0
    %s151 = sadd.s32 %s150, 1
    %s152 = scalar_select %p149, %s150, %s151
    %p155 = pneg %p149
    %p156 = scmp.eq.s32.totalorder %s14, 1
    %p157 = por %p155, %p156
    %p158 = scmp.ne.s32.totalorder %s150, %s153
    %p159 = scmp.eq.s32.totalorder %s14, 0
    %p160 = por %p158, %p159
    %p161 = scmp.ne.s32.totalorder %s150, %s153
    %p162 = scmp.eq.s32.totalorder %s19, 1
    %p163 = por %p161, %p162
    %p164 = scmp.ne.s32.totalorder %s153, %s154
    %p165 = scmp.eq.s32.totalorder %s19, 0
    %p166 = por %p164, %p165
    %p167 = scmp.ne.s32.totalorder %s153, %s154
    %p168 = scmp.eq.s32.totalorder %s20, 1
    %p169 = por %p167, %p168
    %p171 = scmp.ne.s32.totalorder %s154, %s170
    %p172 = scmp.eq.s32.totalorder %s20, 0
    %p173 = por %p171, %p172
    %s174 = ssub.s32 %s21, %s33
    %s175 = ssub.s32 %s22, %s29
    %s176 = sor.u32 %s174, %s175
    %p177 = scmp.eq.s32.totalorder %s176, 0
    %s179 = sadd.s32 %s178, 1
    %s180 = scalar_select %p177, %s178, %s179
    %p183 = pneg %p177
    %p184 = scmp.eq.s32.totalorder %s14, 1
    %p185 = por %p183, %p184
    %p186 = scmp.ne.s32.totalorder %s178, %s181
    %p187 = scmp.eq.s32.totalorder %s14, 0
    %p188 = por %p186, %p187
    %p189 = scmp.ne.s32.totalorder %s178, %s181
    %p190 = scmp.eq.s32.totalorder %s19, 1
    %p191 = por %p189, %p190
    %p192 = scmp.ne.s32.totalorder %s181, %s182
    %p193 = scmp.eq.s32.totalorder %s19, 0
    %p194 = por %p192, %p193
    %p195 = scmp.ne.s32.totalorder %s181, %s182
    %p196 = scmp.eq.s32.totalorder %s20, 1
    %p197 = por %p195, %p196
    %p199 = scmp.ne.s32.totalorder %s182, %s198
    %p200 = scmp.eq.s32.totalorder %s20, 0
    %p201 = por %p199, %p200
    %s203 = sadd.s32 %s202, 1
    %p206 = scmp.eq.s32.totalorder %s14, 1
    %p207 = scmp.ne.s32.totalorder %s202, %s204
    %p208 = scmp.eq.s32.totalorder %s14, 0
    %p209 = por %p207, %p208
    %p210 = scmp.ne.s32.totalorder %s202, %s204
    %p211 = scmp.eq.s32.totalorder %s19, 1
    %p212 = por %p210, %p211
    %p213 = scmp.ne.s32.totalorder %s204, %s205
    %p214 = scmp.eq.s32.totalorder %s19, 0
    %p215 = por %p213, %p214
    %p216 = scmp.ne.s32.totalorder %s204, %s205
    %p217 = scmp.eq.s32.totalorder %s20, 1
    %p218 = por %p216, %p217
    %p220 = scmp.ne.s32.totalorder %s205, %s219
    %p221 = scmp.eq.s32.totalorder %s20, 0
    %p222 = por %p220, %p221
    %s224 = sadd.s32 %s223, 1
    %p227 = scmp.eq.s32.totalorder %s14, 1
    %p228 = scmp.ne.s32.totalorder %s223, %s225
    %p229 = scmp.eq.s32.totalorder %s14, 0
    %p230 = por %p228, %p229
    %p231 = scmp.ne.s32.totalorder %s223, %s225
    %p232 = scmp.eq.s32.totalorder %s19, 1
    %p233 = por %p231, %p232
    %p234 = scmp.ne.s32.totalorder %s225, %s226
    %p235 = scmp.eq.s32.totalorder %s19, 0
    %p236 = por %p234, %p235
    %p237 = scmp.ne.s32.totalorder %s225, %s226
    %p238 = scmp.eq.s32.totalorder %s20, 1
    %p239 = por %p237, %p238
    %p241 = scmp.ne.s32.totalorder %s226, %s240
    %p242 = scmp.eq.s32.totalorder %s20, 0
    %p243 = por %p241, %p242
    %s244 = ssub.s32 %s21, %s33
    %s245 = ssub.s32 %s22, %s29
    %s246 = sor.u32 %s244, %s245
    %p247 = scmp.eq.s32.totalorder %s246, 0
    %s249 = sadd.s32 %s248, 1
    %s250 = scalar_select %p247, %s248, %s249
    %p253 = pneg %p247
    %p254 = scmp.eq.s32.totalorder %s14, 1
    %p255 = por %p253, %p254
    %p256 = scmp.ne.s32.totalorder %s248, %s251
    %p257 = scmp.eq.s32.totalorder %s14, 0
    %p258 = por %p256, %p257
    %p259 = scmp.ne.s32.totalorder %s248, %s251
    %p260 = scmp.eq.s32.totalorder %s19, 1
    %p261 = por %p259, %p260
    %p262 = scmp.ne.s32.totalorder %s251, %s252
    %p263 = scmp.eq.s32.totalorder %s19, 0
    %p264 = por %p262, %p263
    %p265 = scmp.ne.s32.totalorder %s251, %s252
    %p266 = scmp.eq.s32.totalorder %s20, 1
    %p267 = por %p265, %p266
    %p269 = scmp.ne.s32.totalorder %s252, %s268
    %p270 = scmp.eq.s32.totalorder %s20, 0
    %p271 = por %p269, %p270
    %p272 = scmp.le.s32.totalorder 1, %s14
    %p273 = scmp.lt.s32.totalorder %s14, 3
    %p274 = pnand %p272, %p273
    %p275 = pneg %p274
    // Predicated region
    $region9: #{downsample_forward.1} parent=5 // pred_check
      _
    $region10: #{downsample_forward.1} parent=5 // pred_check_branch
      %277 = sbr.rel (%p274) target = $region12
    $region11: #{downsample_forward.1} parent=5 // pred_region
      %s278 = ssub.s32 %s14, 1
      // Predicated region
      $region13: #{downsample_forward.1} parent=11 // pred_check
        %p279 = pneg %p215
      $region14: #{downsample_forward.1} parent=11 // pred_check_branch
        %281 = sbr.rel (%p279) target = $region16
      $region15: #{downsample_forward.1} parent=11 // pred_region
        _
      $region16: #{downsample_forward.1} parent=11 // pred_fallthru
        _
      // Predicated region
      $region17: #{downsample_forward.1} parent=11 // pred_check
        %p282 = pneg %p236
      $region18: #{downsample_forward.1} parent=11 // pred_check_branch
        %284 = sbr.rel (%p282) target = $region20
      $region19: #{downsample_forward.1} parent=11 // pred_region
        _
      $region20: #{downsample_forward.1} parent=11 // pred_fallthru
        _
    $region12: #{downsample_forward.1} parent=5 // pred_fallthru
      _
    %p285 = scmp.lt.s32.totalorder %s14, 2
    // Predicated region
    $region21: #{downsample_forward.1} parent=5 // pred_check
      %p286 = pneg %p285
    $region22: #{downsample_forward.1} parent=5 // pred_check_branch
      %288 = sbr.rel (%p286) target = $region24
    $region23: #{downsample_forward.1} parent=5 // pred_region
      // Predicated region
      $region25: #{downsample_forward.1} parent=23 // pred_check
        %p289 = pneg %p48
      $region26: #{downsample_forward.1} parent=23 // pred_check_branch
        %291 = sbr.rel (%p289) target = $region28
      $region27: #{downsample_forward.1} parent=23 // pred_region
        %s292 = smul.u32 8, %s22
        %s293 = ssub.s32 9, %s292
        %p294 = scmp.lt.s32.totalorder %s293, 8
        %s295 = scalar_select %p294, %s293, 8
        %s296 = smul.u32 64, %s295
        %s297 = smul.u32 %s296, 2
        %p298 = scmp.lt.s32.totalorder %s21, 1
        %s299 = scalar_select %p298, %s21, 1
        %p300 = scmp.lt.s32.totalorder %s292, 8
        %s301 = scalar_select %p300, %s292, 8
        %s302 = smul.addr %s301, 2
        %s303 = smul.addr %s299, 18
        %s304 = sadd.s32 %s302, %s303
        %s305 = smul.addr %s304, 4
        %s306 = scalar_lea.vmem %s0, %s305
        %s307 = smul.u32 8, %s22
        %s308 = ssub.s32 9, %s307
        %p309 = scmp.lt.s32.totalorder %s308, 8
        %s310 = scalar_select %p309, %s308, 8
        %s311 = smul.u32 64, %s310
        %s312 = smul.u32 %s311, 2
      $region28: #{downsample_forward.1} parent=23 // pred_fallthru
        _
      // Predicated region
      $region29: #{downsample_forward.1} parent=23 // pred_check
        %p313 = pneg %p76
      $region30: #{downsample_forward.1} parent=23 // pred_check_branch
        %315 = sbr.rel (%p313) target = $region32
      $region31: #{downsample_forward.1} parent=23 // pred_region
        %p316 = scmp.lt.s32.totalorder %s21, 1
        %s317 = scalar_select %p316, %s21, 1
        %p318 = scmp.lt.s32.totalorder %s22, 0
        %s319 = scalar_select %p318, %s22, 0
        %s320 = smul.addr %s319, 2
        %s321 = smul.addr %s317, 2
        %s322 = sadd.s32 %s320, %s321
        %s323 = smul.addr %s322, 4
        %s324 = scalar_lea.vmem %s1, %s323
      $region32: #{downsample_forward.1} parent=23 // pred_fallthru
        _
      // Predicated region
      $region33: #{downsample_forward.1} parent=23 // pred_check
        %p325 = pneg %p104
      $region34: #{downsample_forward.1} parent=23 // pred_check_branch
        %327 = sbr.rel (%p325) target = $region36
      $region35: #{downsample_forward.1} parent=23 // pred_region
        %s328 = smul.u32 8, %s22
        %s329 = ssub.s32 9, %s328
        %p330 = scmp.lt.s32.totalorder %s329, 8
        %s331 = scalar_select %p330, %s329, 8
        %s332 = smul.u32 64, %s331
        %s333 = smul.u32 %s332, 2
        %p334 = scmp.lt.s32.totalorder %s21, 1
        %s335 = scalar_select %p334, %s21, 1
        %p336 = scmp.lt.s32.totalorder %s328, 8
        %s337 = scalar_select %p336, %s328, 8
        %s338 = smul.addr %s337, 2
        %s339 = smul.addr %s335, 18
        %s340 = sadd.s32 %s338, %s339
        %s341 = smul.addr %s340, 4
        %s342 = scalar_lea.vmem %s2, %s341
        %s343 = smul.u32 8, %s22
        %s344 = ssub.s32 9, %s343
        %p345 = scmp.lt.s32.totalorder %s344, 8
        %s346 = scalar_select %p345, %s344, 8
        %s347 = smul.u32 64, %s346
        %s348 = smul.u32 %s347, 2
      $region36: #{downsample_forward.1} parent=23 // pred_fallthru
        _
      // Predicated region
      $region37: #{downsample_forward.1} parent=23 // pred_check
        %p349 = pneg %p132
      $region38: #{downsample_forward.1} parent=23 // pred_check_branch
        %351 = sbr.rel (%p349) target = $region40
      $region39: #{downsample_forward.1} parent=23 // pred_region
        %p352 = scmp.lt.s32.totalorder %s21, 1
        %s353 = scalar_select %p352, %s21, 1
        %p354 = scmp.lt.s32.totalorder %s22, 0
        %s355 = scalar_select %p354, %s22, 0
        %s356 = smul.addr %s355, 2
        %s357 = smul.addr %s353, 2
        %s358 = sadd.s32 %s356, %s357
        %s359 = smul.addr %s358, 4
        %s360 = scalar_lea.vmem %s3, %s359
      $region40: #{downsample_forward.1} parent=23 // pred_fallthru
        _
      // Predicated region
      $region41: #{downsample_forward.1} parent=23 // pred_check
        %p361 = pneg %p160
      $region42: #{downsample_forward.1} parent=23 // pred_check_branch
        %363 = sbr.rel (%p361) target = $region44
      $region43: #{downsample_forward.1} parent=23 // pred_region
        %s364 = smul.u32 8, %s22
        %s365 = ssub.s32 9, %s364
        %p366 = scmp.lt.s32.totalorder %s365, 8
        %s367 = scalar_select %p366, %s365, 8
        %s368 = smul.u32 64, %s367
        %s369 = smul.u32 %s368, 2
        %p370 = scmp.lt.s32.totalorder %s21, 1
        %s371 = scalar_select %p370, %s21, 1
        %p372 = scmp.lt.s32.totalorder %s364, 8
        %s373 = scalar_select %p372, %s364, 8
        %s374 = smul.addr %s373, 2
        %s375 = smul.addr %s371, 18
        %s376 = sadd.s32 %s374, %s375
        %s377 = smul.addr %s376, 4
        %s378 = scalar_lea.vmem %s4, %s377
        %s379 = smul.u32 8, %s22
        %s380 = ssub.s32 9, %s379
        %p381 = scmp.lt.s32.totalorder %s380, 8
        %s382 = scalar_select %p381, %s380, 8
        %s383 = smul.u32 64, %s382
        %s384 = smul.u32 %s383, 2
      $region44: #{downsample_forward.1} parent=23 // pred_fallthru
        _
      // Predicated region
      $region45: #{downsample_forward.1} parent=23 // pred_check
        %p385 = pneg %p188
      $region46: #{downsample_forward.1} parent=23 // pred_check_branch
        %387 = sbr.rel (%p385) target = $region48
      $region47: #{downsample_forward.1} parent=23 // pred_region
        %s388 = smul.u32 8, %s22
        %s389 = ssub.s32 9, %s388
        %p390 = scmp.lt.s32.totalorder %s389, 8
        %s391 = scalar_select %p390, %s389, 8
        %s392 = smul.u32 64, %s391
        %s393 = smul.u32 %s392, 2
        %p394 = scmp.lt.s32.totalorder %s21, 1
        %s395 = scalar_select %p394, %s21, 1
        %p396 = scmp.lt.s32.totalorder %s388, 8
        %s397 = scalar_select %p396, %s388, 8
        %s398 = smul.addr %s397, 2
        %s399 = smul.addr %s395, 18
        %s400 = sadd.s32 %s398, %s399
        %s401 = smul.addr %s400, 4
        %s402 = scalar_lea.vmem %s5, %s401
        %s403 = smul.u32 8, %s22
        %s404 = ssub.s32 9, %s403
        %p405 = scmp.lt.s32.totalorder %s404, 8
        %s406 = scalar_select %p405, %s404, 8
        %s407 = smul.u32 64, %s406
        %s408 = smul.u32 %s407, 2
      $region48: #{downsample_forward.1} parent=23 // pred_fallthru
        _
    $region24: #{downsample_forward.1} parent=5 // pred_fallthru
      _
    %p409 = scmp.le.s32.totalorder 1, %s14
    %p410 = scmp.lt.s32.totalorder %s14, 3
    %p411 = pnand %p409, %p410
    %p412 = pneg %p411
    // Predicated region
    $region49: #{downsample_forward.1} parent=5 // pred_check
      _
    $region50: #{downsample_forward.1} parent=5 // pred_check_branch
      %414 = sbr.rel (%p411) target = $region52
    $region51: #{downsample_forward.1} parent=5 // pred_region
      %s415 = ssub.s32 %s14, 1
      %s416 = smul.u32 8, %s24
      %s417 = ssub.s32 9, %s416
      %p418 = scmp.lt.s32.totalorder %s417, 8
      %s419 = scalar_select %p418, %s417, 8
      %s420 = smul.u32 64, %s419
      %s421 = smul.u32 %s420, 2
      %p422 = scmp.lt.s32.totalorder %s23, 1
      %s423 = scalar_select %p422, %s23, 1
      %p424 = scmp.lt.s32.totalorder %s416, 8
      %s425 = scalar_select %p424, %s416, 8
      %s426 = smul.addr %s425, 2
      %s427 = smul.addr %s423, 18
      %s428 = sadd.s32 %s426, %s427
      %s429 = smul.addr %s428, 4
      %s430 = scalar_lea.vmem %s0, %s429
      %p431 = pneg %p54
      %p432 = pneg %p51
      %p433 = scmp.lt.s32.totalorder %s23, 1
      %s434 = scalar_select %p433, %s23, 1
      %p435 = scmp.lt.s32.totalorder %s24, 0
      %s436 = scalar_select %p435, %s24, 0
      %s437 = smul.addr %s436, 2
      %s438 = smul.addr %s434, 2
      %s439 = sadd.s32 %s437, %s438
      %s440 = smul.addr %s439, 4
      %s441 = scalar_lea.vmem %s1, %s440
      %p442 = pneg %p82
      %p443 = pneg %p79
      %s444 = smul.u32 8, %s24
      %s445 = ssub.s32 9, %s444
      %p446 = scmp.lt.s32.totalorder %s445, 8
      %s447 = scalar_select %p446, %s445, 8
      %s448 = smul.u32 64, %s447
      %s449 = smul.u32 %s448, 2
      %p450 = scmp.lt.s32.totalorder %s23, 1
      %s451 = scalar_select %p450, %s23, 1
      %p452 = scmp.lt.s32.totalorder %s444, 8
      %s453 = scalar_select %p452, %s444, 8
      %s454 = smul.addr %s453, 2
      %s455 = smul.addr %s451, 18
      %s456 = sadd.s32 %s454, %s455
      %s457 = smul.addr %s456, 4
      %s458 = scalar_lea.vmem %s2, %s457
      %p459 = pneg %p110
      %p460 = pneg %p107
      %p461 = scmp.lt.s32.totalorder %s23, 1
      %s462 = scalar_select %p461, %s23, 1
      %p463 = scmp.lt.s32.totalorder %s24, 0
      %s464 = scalar_select %p463, %s24, 0
      %s465 = smul.addr %s464, 2
      %s466 = smul.addr %s462, 2
      %s467 = sadd.s32 %s465, %s466
      %s468 = smul.addr %s467, 4
      %s469 = scalar_lea.vmem %s3, %s468
      %p470 = pneg %p138
      %p471 = pneg %p135
      %s472 = smul.u32 8, %s24
      %s473 = ssub.s32 9, %s472
      %p474 = scmp.lt.s32.totalorder %s473, 8
      %s475 = scalar_select %p474, %s473, 8
      %s476 = smul.u32 64, %s475
      %s477 = smul.u32 %s476, 2
      %p478 = scmp.lt.s32.totalorder %s23, 1
      %s479 = scalar_select %p478, %s23, 1
      %p480 = scmp.lt.s32.totalorder %s472, 8
      %s481 = scalar_select %p480, %s472, 8
      %s482 = smul.addr %s481, 2
      %s483 = smul.addr %s479, 18
      %s484 = sadd.s32 %s482, %s483
      %s485 = smul.addr %s484, 4
      %s486 = scalar_lea.vmem %s4, %s485
      %p487 = pneg %p166
      %p488 = pneg %p163
      %s489 = smul.u32 8, %s24
      %s490 = ssub.s32 9, %s489
      %p491 = scmp.lt.s32.totalorder %s490, 8
      %s492 = scalar_select %p491, %s490, 8
      %s493 = smul.u32 64, %s492
      %s494 = smul.u32 %s493, 2
      %p495 = scmp.lt.s32.totalorder %s23, 1
      %s496 = scalar_select %p495, %s23, 1
      %p497 = scmp.lt.s32.totalorder %s489, 8
      %s498 = scalar_select %p497, %s489, 8
      %s499 = smul.addr %s498, 2
      %s500 = smul.addr %s496, 18
      %s501 = sadd.s32 %s499, %s500
      %s502 = smul.addr %s501, 4
      %s503 = scalar_lea.vmem %s5, %s502
      %p504 = pneg %p194
      %p505 = pneg %p191
      %p506 = pneg %p215
      %p507 = pneg %p212
      %p508 = pneg %p236
      %p509 = pneg %p233
      %p510 = pneg %p264
      %p511 = pneg %p261
      %s512 = smul.u32 8, %s24
      %p513 = scmp.lt.s32.totalorder %s23, 1
      %s514 = scalar_select %p513, %s23, 1
      %p515 = scmp.lt.s32.totalorder %s512, 7
      %s516 = scalar_select %p515, %s512, 7
      %s517 = smul.addr %s514, 8
      %s518 = sadd.s32 %s516, %s517
      %s519 = smul.addr %s518, 4
      %s520 = scalar_lea.vmem %s8, %s519
      %s521 = smul.u32 8, %s24
      %s522 = ssub.s32 9, %s521
      %p523 = scmp.lt.s32.totalorder %s522, 8
      %s524 = scalar_select %p523, %s522, 8
      %s525 = smul.u32 64, %s524
      %s526 = smul.u32 %s525, 2
      %p527 = scmp.lt.s32.totalorder %s23, 1
      %s528 = scalar_select %p527, %s23, 1
      %p529 = scmp.lt.s32.totalorder %s521, 8
      %s530 = scalar_select %p529, %s521, 8
      %s531 = smul.addr %s530, 2
      %s532 = smul.addr %s528, 18
      %s533 = sadd.s32 %s531, %s532
      %s534 = smul.addr %s533, 4
      %s535 = scalar_lea.vmem %s0, %s534
      %s536 = smul.u32 8, %s24
      %s537 = ssub.s32 9, %s536
      %p538 = scmp.lt.s32.totalorder %s537, 8
      %s539 = scalar_select %p538, %s537, 8
      %s540 = smul.u32 64, %s539
      %s541 = smul.u32 %s540, 2
      %p542 = scmp.lt.s32.totalorder %s23, 1
      %s543 = scalar_select %p542, %s23, 1
      %p544 = scmp.lt.s32.totalorder %s24, 0
      %s545 = scalar_select %p544, %s24, 0
      %s546 = smul.addr %s545, 2
      %s547 = smul.addr %s543, 2
      %s548 = sadd.s32 %s546, %s547
      %s549 = smul.addr %s548, 4
      %s550 = scalar_lea.vmem %s1, %s549
      %s551 = smul.u32 8, %s24
      %s552 = ssub.s32 9, %s551
      %p553 = scmp.lt.s32.totalorder %s552, 8
      %s554 = scalar_select %p553, %s552, 8
      %s555 = smul.u32 64, %s554
      %s556 = smul.u32 %s555, 2
      %p557 = scmp.lt.s32.totalorder %s23, 1
      %s558 = scalar_select %p557, %s23, 1
      %p559 = scmp.lt.s32.totalorder %s551, 8
      %s560 = scalar_select %p559, %s551, 8
      %s561 = smul.addr %s560, 2
      %s562 = smul.addr %s558, 18
      %s563 = sadd.s32 %s561, %s562
      %s564 = smul.addr %s563, 4
      %s565 = scalar_lea.vmem %s2, %s564
      %s566 = smul.u32 8, %s24
      %s567 = ssub.s32 9, %s566
      %p568 = scmp.lt.s32.totalorder %s567, 8
      %s569 = scalar_select %p568, %s567, 8
      %s570 = smul.u32 64, %s569
      %s571 = smul.u32 %s570, 2
      %p572 = scmp.lt.s32.totalorder %s23, 1
      %s573 = scalar_select %p572, %s23, 1
      %p574 = scmp.lt.s32.totalorder %s24, 0
      %s575 = scalar_select %p574, %s24, 0
      %s576 = smul.addr %s575, 2
      %s577 = smul.addr %s573, 2
      %s578 = sadd.s32 %s576, %s577
      %s579 = smul.addr %s578, 4
      %s580 = scalar_lea.vmem %s3, %s579
      %s581 = smul.u32 8, %s24
      %s582 = ssub.s32 9, %s581
      %p583 = scmp.lt.s32.totalorder %s582, 8
      %s584 = scalar_select %p583, %s582, 8
      %s585 = smul.u32 64, %s584
      %s586 = smul.u32 %s585, 2
      %p587 = scmp.lt.s32.totalorder %s23, 1
      %s588 = scalar_select %p587, %s23, 1
      %p589 = scmp.lt.s32.totalorder %s581, 8
      %s590 = scalar_select %p589, %s581, 8
      %s591 = smul.addr %s590, 2
      %s592 = smul.addr %s588, 18
      %s593 = sadd.s32 %s591, %s592
      %s594 = smul.addr %s593, 4
      %s595 = scalar_lea.vmem %s4, %s594
      %s596 = smul.u32 8, %s24
      %s597 = ssub.s32 9, %s596
      %p598 = scmp.lt.s32.totalorder %s597, 8
      %s599 = scalar_select %p598, %s597, 8
      %s600 = smul.u32 64, %s599
      %s601 = smul.u32 %s600, 2
      %s602 = smul.u32 8, %s24
      %s603 = ssub.s32 9, %s602
      %p604 = scmp.lt.s32.totalorder %s603, 8
      %s605 = scalar_select %p604, %s603, 8
      %s606 = smul.u32 64, %s605
      %s607 = smul.u32 %s606, 2
      %p608 = scmp.lt.s32.totalorder %s23, 1
      %s609 = scalar_select %p608, %s23, 1
      %p610 = scmp.lt.s32.totalorder %s602, 8
      %s611 = scalar_select %p610, %s602, 8
      %s612 = smul.addr %s611, 2
      %s613 = smul.addr %s609, 18
      %s614 = sadd.s32 %s612, %s613
      %s615 = smul.addr %s614, 4
      %s616 = scalar_lea.vmem %s5, %s615
      %s617 = smul.u32 8, %s24
      %s618 = ssub.s32 9, %s617
      %p619 = scmp.lt.s32.totalorder %s618, 8
      %s620 = scalar_select %p619, %s618, 8
      %s621 = smul.u32 64, %s620
      %s622 = smul.u32 %s621, 2
      %s623 = smul.u32 8, %s24
      %p624 = scmp.lt.s32.totalorder %s23, 1
      %s625 = scalar_select %p624, %s23, 1
      %p626 = scmp.lt.s32.totalorder %s623, 7
      %s627 = scalar_select %p626, %s623, 7
      %s628 = smul.addr %s625, 8
      %s629 = sadd.s32 %s627, %s628
      %s630 = smul.addr %s629, 4
      %s631 = scalar_lea.vmem %s8, %s630
      %s632 = smul.u32 8, %s24
      %v634 = vld [vmem:[%s535] sm:$0xf]
      %v635 = vld [vmem:[%s535 + $0x4] sm:$0x1]
      %v636 = vld [vmem:[%s535 + $0x8] sm:$0xf]
      %v637 = vld [vmem:[%s535 + $0xc] sm:$0x1]
      %v638 = vld [vmem:[%s535 + $0x10] sm:$0xf]
      %v639 = vld [vmem:[%s535 + $0x14] sm:$0x1]
      %v640 = vld [vmem:[%s535 + $0x18] sm:$0xf]
      %v641 = vld [vmem:[%s535 + $0x1c] sm:$0x1]
      %v642 = vld [vmem:[%s535 + $0x20] sm:$0xf]
      %v643 = vld [vmem:[%s535 + $0x24] sm:$0x1]
      %v644 = vld [vmem:[%s535 + $0x28] sm:$0xf]
      %v645 = vld [vmem:[%s535 + $0x2c] sm:$0x1]
      %v646 = vld [vmem:[%s535 + $0x30] sm:$0xf]
      %v647 = vld [vmem:[%s535 + $0x34] sm:$0x1]
      %v648 = vld [vmem:[%s535 + $0x38] sm:$0xf]
      %v649 = vld [vmem:[%s535 + $0x3c] sm:$0x1]
      %v650 = vld [vmem:[%s565] sm:$0xf]
      %v651 = vld [vmem:[%s565 + $0x8] sm:$0xf]
      %v652 = vld [vmem:[%s565 + $0x10] sm:$0xf]
      %v653 = vld [vmem:[%s565 + $0x18] sm:$0xf]
      %v654 = vld [vmem:[%s565 + $0x20] sm:$0xf]
      %v655 = vld [vmem:[%s565 + $0x28] sm:$0xf]
      %v656 = vld [vmem:[%s565 + $0x30] sm:$0xf]
      %v657 = vld [vmem:[%s565 + $0x38] sm:$0xf]
      %v658 = vld [vmem:[%s595] sm:$0xf]
      %v659 = vld [vmem:[%s595 + $0x4] sm:$0x1]
      %v660 = vld [vmem:[%s595 + $0x8] sm:$0xf]
      %v661 = vld [vmem:[%s595 + $0xc] sm:$0x1]
      %v662 = vld [vmem:[%s595 + $0x10] sm:$0xf]
      %v663 = vld [vmem:[%s595 + $0x14] sm:$0x1]
      %v664 = vld [vmem:[%s595 + $0x18] sm:$0xf]
      %v665 = vld [vmem:[%s595 + $0x1c] sm:$0x1]
      %v666 = vld [vmem:[%s595 + $0x20] sm:$0xf]
      %v667 = vld [vmem:[%s595 + $0x24] sm:$0x1]
      %v668 = vld [vmem:[%s595 + $0x28] sm:$0xf]
      %v669 = vld [vmem:[%s595 + $0x2c] sm:$0x1]
      %v670 = vld [vmem:[%s595 + $0x30] sm:$0xf]
      %v671 = vld [vmem:[%s595 + $0x34] sm:$0x1]
      %v672 = vld [vmem:[%s595 + $0x38] sm:$0xf]
      %v673 = vld [vmem:[%s595 + $0x3c] sm:$0x1]
      %v674 = vld [vmem:[%s616] sm:$0xf]
      %v675 = vld [vmem:[%s616 + $0x8] sm:$0xf]
      %v676 = vld [vmem:[%s616 + $0x10] sm:$0xf]
      %v677 = vld [vmem:[%s616 + $0x18] sm:$0xf]
      %v678 = vld [vmem:[%s616 + $0x20] sm:$0xf]
      %v679 = vld [vmem:[%s616 + $0x28] sm:$0xf]
      %v680 = vld [vmem:[%s616 + $0x30] sm:$0xf]
      %v681 = vld [vmem:[%s616 + $0x38] sm:$0xf]
      %v682 = vld [vmem:[%s550] sm:$0xf]
      %v683 = vld [vmem:[%s550 + $0x4] sm:$0x1]
      %v684 = vld [vmem:[%s580] sm:$0xf]
      %v685 = vld [vmem:[%s6] sm:$0x3]
      %v686 = vld [vmem:[%s6] sm:$0xc]
      %v695 = vunpack.c.l.b16 %v650
      %v696 = vunpack.c.l.b16 %v651
      %v697 = vunpack.c.l.b16 %v652
      %v698 = vunpack.c.l.b16 %v653
      %v699 = vunpack.c.l.b16 %v654
      %v700 = vunpack.c.l.b16 %v655
      %v701 = vunpack.c.l.b16 %v656
      %v702 = vunpack.c.l.b16 %v657
      %v703 = vpack.c.b16 %v696, %v695
      %v704 = vpack.c.b16 %v698, %v697
      %v705 = vpack.c.b16 %v700, %v699
      %v706 = vpack.c.b16 %v702, %v701
      %v708 = vunpack.c.l.b16 %v686
      %v709 = vpack.c.b16 %v708, %v708
      %v710 = vrot.slane %v709, 2
      %vm711 = vcmask 31744
      %v713 = vsel %vm711, %v703, 0
      %v716 = vsel %vm711, %v704, 0
      %v719 = vsel %vm711, %v705, 0
      %v722 = vsel %vm711, %v706, 0
      %vm724 = vcmask 1041408
      %v726 = vsel %vm724, %v710, 0
      %728 = vmatprep.subr.bf16.mxu0 0
      %729 = vmatpush1.bf16.msra.mxu0 0
      %730 = vmatprep.subr.bf16.mxu0 0
      %731 = vmatpush1.bf16.msra.mxu0 0
      %732 = vmatprep.subr.bf16.mxu0 0
      %733 = vmatpush1.bf16.msra.mxu0 0
      %734 = vmatprep.subr.bf16.mxu0 0
      %735 = vmatpush1.bf16.msra.mxu0 0
      %736 = vmatprep.subr.bf16.mxu0 0
      %737 = vmatpush1.bf16.msra.mxu0 0
      %738 = vmatprep.subr.bf16.mxu0 0
      %739 = vmatpush1.bf16.msra.mxu0 0
      %740 = vmatprep.subr.bf16.mxu0 0
      %741 = vmatpush1.bf16.msra.mxu0 0
      %742 = vmatprep.subr.bf16.mxu0 0
      %743 = vmatpush1.bf16.msra.mxu0 %v726
      %744 = vmatprep.subr.bf16.mxu0 0
      %745 = vmatpush2.bf16.msra.mxu0 0
      %746 = vmatprep.subr.bf16.mxu0 0
      %747 = vmatpush2.bf16.msra.mxu0 0
      %748 = vmatprep.subr.bf16.mxu0 0
      %749 = vmatpush2.bf16.msra.mxu0 0
      %750 = vmatprep.subr.bf16.mxu0 0
      %751 = vmatpush2.bf16.msra.mxu0 0
      %752 = vmatprep.subr.bf16.mxu0 0
      %753 = vmatpush2.bf16.msra.mxu0 0
      %754 = vmatprep.subr.bf16.mxu0 0
      %755 = vmatpush2.bf16.msra.mxu0 0
      %756 = vmatprep.subr.bf16.mxu0 0
      %757 = vmatpush2.bf16.msra.mxu0 0
      %758 = vmatprep.subr.bf16.mxu0 0
      %759 = vmatpush2.bf16.msra.mxu0 0
      %760 = vmatprep.mubr.bf16.mxu0 0
      %761 = vmatmul.mubr.bf16.gmra.mxu0 %v713
      %v762 = vpop.f32.mrf.mxu0
      %v763 = vadd.f32 0.0, %v762
      %v764 = vpop.f32.mrf.mxu0
      %v765 = vpop.f32.mrf.mxu0
      %v766 = vadd.f32 0.0, %v765
      %v767 = vpop.f32.mrf.mxu0
      %768 = vmatprep.mubr.bf16.mxu0 0
      %769 = vmatmul.mubr.bf16.gmra.mxu0 %v716
      %v770 = vpop.f32.mrf.mxu0
      %v771 = vadd.f32 0.0, %v770
      %v772 = vpop.f32.mrf.mxu0
      %v773 = vpop.f32.mrf.mxu0
      %v774 = vadd.f32 0.0, %v773
      %v775 = vpop.f32.mrf.mxu0
      %776 = vmatprep.mubr.bf16.mxu0 0
      %777 = vmatmul.mubr.bf16.gmra.mxu0 %v719
      %v778 = vpop.f32.mrf.mxu0
      %v779 = vadd.f32 0.0, %v778
      %v780 = vpop.f32.mrf.mxu0
      %v781 = vpop.f32.mrf.mxu0
      %v782 = vadd.f32 0.0, %v781
      %v783 = vpop.f32.mrf.mxu0
      %784 = vmatprep.mubr.bf16.mxu0 0
      %785 = vmatmul.mubr.bf16.gmra.mxu0 %v722
      %v786 = vpop.f32.mrf.mxu0
      %v787 = vadd.f32 0.0, %v786
      %v788 = vpop.f32.mrf.mxu0
      %v789 = vpop.f32.mrf.mxu0
      %v790 = vadd.f32 0.0, %v789
      %v791 = vpop.f32.mrf.mxu0
      %792 = vdwg.mxu0
      %v801 = vunpack.c.l.b16 %v634
      %v802 = vunpack.c.l.b16 %v636
      %v803 = vunpack.c.l.b16 %v638
      %v804 = vunpack.c.l.b16 %v640
      %v805 = vunpack.c.l.b16 %v642
      %v806 = vunpack.c.l.b16 %v644
      %v807 = vunpack.c.l.b16 %v646
      %v808 = vunpack.c.l.b16 %v648
      %v809 = vpack.c.b16 %v802, %v801
      %v810 = vpack.c.b16 %v804, %v803
      %v811 = vpack.c.b16 %v806, %v805
      %v812 = vpack.c.b16 %v808, %v807
      %v814 = vsel %vm711, %v809, 0
      %v817 = vsel %vm711, %v810, 0
      %v820 = vsel %vm711, %v811, 0
      %v823 = vsel %vm711, %v812, 0
      %v826 = vsel %vm724, %v685, 0
      %828 = vmatprep.subr.bf16.mxu0 0
      %829 = vmatpush1.bf16.msra.mxu0 0
      %830 = vmatprep.subr.bf16.mxu0 0
      %831 = vmatpush1.bf16.msra.mxu0 0
      %832 = vmatprep.subr.bf16.mxu0 0
      %833 = vmatpush1.bf16.msra.mxu0 0
      %834 = vmatprep.subr.bf16.mxu0 0
      %835 = vmatpush1.bf16.msra.mxu0 0
      %836 = vmatprep.subr.bf16.mxu0 0
      %837 = vmatpush1.bf16.msra.mxu0 0
      %838 = vmatprep.subr.bf16.mxu0 0
      %839 = vmatpush1.bf16.msra.mxu0 0
      %840 = vmatprep.subr.bf16.mxu0 0
      %841 = vmatpush1.bf16.msra.mxu0 0
      %842 = vmatprep.subr.bf16.mxu0 0
      %843 = vmatpush1.bf16.msra.mxu0 %v826
      %844 = vmatprep.subr.bf16.mxu0 0
      %845 = vmatpush2.bf16.msra.mxu0 0
      %846 = vmatprep.subr.bf16.mxu0 0
      %847 = vmatpush2.bf16.msra.mxu0 0
      %848 = vmatprep.subr.bf16.mxu0 0
      %849 = vmatpush2.bf16.msra.mxu0 0
      %850 = vmatprep.subr.bf16.mxu0 0
      %851 = vmatpush2.bf16.msra.mxu0 0
      %852 = vmatprep.subr.bf16.mxu0 0
      %853 = vmatpush2.bf16.msra.mxu0 0
      %854 = vmatprep.subr.bf16.mxu0 0
      %855 = vmatpush2.bf16.msra.mxu0 0
      %856 = vmatprep.subr.bf16.mxu0 0
      %857 = vmatpush2.bf16.msra.mxu0 0
      %858 = vmatprep.subr.bf16.mxu0 0
      %859 = vmatpush2.bf16.msra.mxu0 0
      %860 = vmatprep.mubr.bf16.mxu0 0
      %861 = vmatmul.mubr.bf16.gmra.mxu0 %v814
      %v862 = vpop.f32.mrf.mxu0
      %v863 = vadd.f32 %v763, %v862
      %v864 = vpop.f32.mrf.mxu0
      %v865 = vpop.f32.mrf.mxu0
      %v866 = vadd.f32 %v766, %v865
      %v867 = vpop.f32.mrf.mxu0
      %868 = vmatprep.mubr.bf16.mxu0 0
      %869 = vmatmul.mubr.bf16.gmra.mxu0 %v817
      %v870 = vpop.f32.mrf.mxu0
      %v871 = vadd.f32 %v771, %v870
      %v872 = vpop.f32.mrf.mxu0
      %v873 = vpop.f32.mrf.mxu0
      %v874 = vadd.f32 %v774, %v873
      %v875 = vpop.f32.mrf.mxu0
      %876 = vmatprep.mubr.bf16.mxu0 0
      %877 = vmatmul.mubr.bf16.gmra.mxu0 %v820
      %v878 = vpop.f32.mrf.mxu0
      %v879 = vadd.f32 %v779, %v878
      %v880 = vpop.f32.mrf.mxu0
      %v881 = vpop.f32.mrf.mxu0
      %v882 = vadd.f32 %v782, %v881
      %v883 = vpop.f32.mrf.mxu0
      %884 = vmatprep.mubr.bf16.mxu0 0
      %885 = vmatmul.mubr.bf16.gmra.mxu0 %v823
      %v886 = vpop.f32.mrf.mxu0
      %v887 = vadd.f32 %v787, %v886
      %v888 = vpop.f32.mrf.mxu0
      %v889 = vpop.f32.mrf.mxu0
      %v890 = vadd.f32 %v790, %v889
      %v891 = vpop.f32.mrf.mxu0
      %892 = vdwg.mxu0
      %vm893 = vsmask.f32 3328
      %vm894 = vsmask.f32 7440
      %vm895 = vmor %vm893, %vm894
      %v897 = vshrl.u32 %v634, 16
      %v899 = vrot.slane %v897, 4
      %v900 = vshll.u32 %v634, 16
      %v902 = vrot.slane %v900, 5
      %v903 = vor.u32 %v899, %v902
      %v904 = vrot.slane %v903, 4
      %v906 = vshll.u32 %v635, 16
      %v908 = vrot.slane %v906, 5
      %v909 = vsel %vm895, %v904, %v908
      %v911 = vshrl.u32 %v636, 16
      %v913 = vrot.slane %v911, 4
      %v914 = vshll.u32 %v636, 16
      %v916 = vrot.slane %v914, 5
      %v917 = vor.u32 %v913, %v916
      %v918 = vrot.slane %v917, 4
      %v920 = vshll.u32 %v637, 16
      %v922 = vrot.slane %v920, 5
      %v923 = vsel %vm895, %v918, %v922
      %v925 = vshrl.u32 %v638, 16
      %v927 = vrot.slane %v925, 4
      %v928 = vshll.u32 %v638, 16
      %v930 = vrot.slane %v928, 5
      %v931 = vor.u32 %v927, %v930
      %v932 = vrot.slane %v931, 4
      %v934 = vshll.u32 %v639, 16
      %v936 = vrot.slane %v934, 5
      %v937 = vsel %vm895, %v932, %v936
      %v939 = vshrl.u32 %v640, 16
      %v941 = vrot.slane %v939, 4
      %v942 = vshll.u32 %v640, 16
      %v944 = vrot.slane %v942, 5
      %v945 = vor.u32 %v941, %v944
      %v946 = vrot.slane %v945, 4
      %v948 = vshll.u32 %v641, 16
      %v950 = vrot.slane %v948, 5
      %v951 = vsel %vm895, %v946, %v950
      %v953 = vshrl.u32 %v642, 16
      %v955 = vrot.slane %v953, 4
      %v956 = vshll.u32 %v642, 16
      %v958 = vrot.slane %v956, 5
      %v959 = vor.u32 %v955, %v958
      %v960 = vrot.slane %v959, 4
      %v962 = vshll.u32 %v643, 16
      %v964 = vrot.slane %v962, 5
      %v965 = vsel %vm895, %v960, %v964
      %v967 = vshrl.u32 %v644, 16
      %v969 = vrot.slane %v967, 4
      %v970 = vshll.u32 %v644, 16
      %v972 = vrot.slane %v970, 5
      %v973 = vor.u32 %v969, %v972
      %v974 = vrot.slane %v973, 4
      %v976 = vshll.u32 %v645, 16
      %v978 = vrot.slane %v976, 5
      %v979 = vsel %vm895, %v974, %v978
      %v981 = vshrl.u32 %v646, 16
      %v983 = vrot.slane %v981, 4
      %v984 = vshll.u32 %v646, 16
      %v986 = vrot.slane %v984, 5
      %v987 = vor.u32 %v983, %v986
      %v988 = vrot.slane %v987, 4
      %v990 = vshll.u32 %v647, 16
      %v992 = vrot.slane %v990, 5
      %v993 = vsel %vm895, %v988, %v992
      %v995 = vshrl.u32 %v648, 16
      %v997 = vrot.slane %v995, 4
      %v998 = vshll.u32 %v648, 16
      %v1000 = vrot.slane %v998, 5
      %v1001 = vor.u32 %v997, %v1000
      %v1002 = vrot.slane %v1001, 4
      %v1004 = vshll.u32 %v649, 16
      %v1006 = vrot.slane %v1004, 5
      %v1007 = vsel %vm895, %v1002, %v1006
      %v1008 = vld [vmem:[%s6 + $0x4] sm:$0x3]
      %v1009 = vunpack.c.l.b16 %v909
      %v1010 = vunpack.c.l.b16 %v923
      %v1011 = vunpack.c.l.b16 %v937
      %v1012 = vunpack.c.l.b16 %v951
      %v1013 = vunpack.c.l.b16 %v965
      %v1014 = vunpack.c.l.b16 %v979
      %v1015 = vunpack.c.l.b16 %v993
      %v1016 = vunpack.c.l.b16 %v1007
      %v1017 = vpack.c.b16 %v1010, %v1009
      %v1018 = vpack.c.b16 %v1012, %v1011
      %v1019 = vpack.c.b16 %v1014, %v1013
      %v1020 = vpack.c.b16 %v1016, %v1015
      %v1022 = vsel %vm711, %v1017, 0
      %v1025 = vsel %vm711, %v1018, 0
      %v1028 = vsel %vm711, %v1019, 0
      %v1031 = vsel %vm711, %v1020, 0
      %v1034 = vsel %vm724, %v1008, 0
      %1036 = vmatprep.subr.bf16.mxu0 0
      %1037 = vmatpush1.bf16.msra.mxu0 0
      %1038 = vmatprep.subr.bf16.mxu0 0
      %1039 = vmatpush1.bf16.msra.mxu0 0
      %1040 = vmatprep.subr.bf16.mxu0 0
      %1041 = vmatpush1.bf16.msra.mxu0 0
      %1042 = vmatprep.subr.bf16.mxu0 0
      %1043 = vmatpush1.bf16.msra.mxu0 0
      %1044 = vmatprep.subr.bf16.mxu0 0
      %1045 = vmatpush1.bf16.msra.mxu0 0
      %1046 = vmatprep.subr.bf16.mxu0 0
      %1047 = vmatpush1.bf16.msra.mxu0 0
      %1048 = vmatprep.subr.bf16.mxu0 0
      %1049 = vmatpush1.bf16.msra.mxu0 0
      %1050 = vmatprep.subr.bf16.mxu0 0
      %1051 = vmatpush1.bf16.msra.mxu0 %v1034
      %1052 = vmatprep.subr.bf16.mxu0 0
      %1053 = vmatpush2.bf16.msra.mxu0 0
      %1054 = vmatprep.subr.bf16.mxu0 0
      %1055 = vmatpush2.bf16.msra.mxu0 0
      %1056 = vmatprep.subr.bf16.mxu0 0
      %1057 = vmatpush2.bf16.msra.mxu0 0
      %1058 = vmatprep.subr.bf16.mxu0 0
      %1059 = vmatpush2.bf16.msra.mxu0 0
      %1060 = vmatprep.subr.bf16.mxu0 0
      %1061 = vmatpush2.bf16.msra.mxu0 0
      %1062 = vmatprep.subr.bf16.mxu0 0
      %1063 = vmatpush2.bf16.msra.mxu0 0
      %1064 = vmatprep.subr.bf16.mxu0 0
      %1065 = vmatpush2.bf16.msra.mxu0 0
      %1066 = vmatprep.subr.bf16.mxu0 0
      %1067 = vmatpush2.bf16.msra.mxu0 0
      %1068 = vmatprep.mubr.bf16.mxu0 0
      %1069 = vmatmul.mubr.bf16.gmra.mxu0 %v1022
      %v1070 = vpop.f32.mrf.mxu0
      %v1071 = vadd.f32 0.0, %v1070
      %v1072 = vpop.f32.mrf.mxu0
      %v1073 = vpop.f32.mrf.mxu0
      %v1074 = vadd.f32 0.0, %v1073
      %v1075 = vpop.f32.mrf.mxu0
      %1076 = vmatprep.mubr.bf16.mxu0 0
      %1077 = vmatmul.mubr.bf16.gmra.mxu0 %v1025
      %v1078 = vpop.f32.mrf.mxu0
      %v1079 = vadd.f32 0.0, %v1078
      %v1080 = vpop.f32.mrf.mxu0
      %v1081 = vpop.f32.mrf.mxu0
      %v1082 = vadd.f32 0.0, %v1081
      %v1083 = vpop.f32.mrf.mxu0
      %1084 = vmatprep.mubr.bf16.mxu0 0
      %1085 = vmatmul.mubr.bf16.gmra.mxu0 %v1028
      %v1086 = vpop.f32.mrf.mxu0
      %v1087 = vadd.f32 0.0, %v1086
      %v1088 = vpop.f32.mrf.mxu0
      %v1089 = vpop.f32.mrf.mxu0
      %v1090 = vadd.f32 0.0, %v1089
      %v1091 = vpop.f32.mrf.mxu0
      %1092 = vmatprep.mubr.bf16.mxu0 0
      %1093 = vmatmul.mubr.bf16.gmra.mxu0 %v1031
      %v1094 = vpop.f32.mrf.mxu0
      %v1095 = vadd.f32 0.0, %v1094
      %v1096 = vpop.f32.mrf.mxu0
      %v1097 = vpop.f32.mrf.mxu0
      %v1098 = vadd.f32 0.0, %v1097
      %v1099 = vpop.f32.mrf.mxu0
      %1100 = vdwg.mxu0
      %v1101 = vadd.f32 %v863, %v1071
      %v1102 = vadd.f32 %v866, %v1074
      %v1103 = vadd.f32 %v871, %v1079
      %v1104 = vadd.f32 %v874, %v1082
      %v1105 = vadd.f32 %v879, %v1087
      %v1106 = vadd.f32 %v882, %v1090
      %v1107 = vadd.f32 %v887, %v1095
      %v1108 = vadd.f32 %v890, %v1098
      %v1109 = vld [vmem:[%s6 + $0x4] sm:$0xc]
      %v1118 = vunpack.c.l.b16 %v658
      %v1119 = vunpack.c.l.b16 %v660
      %v1120 = vunpack.c.l.b16 %v662
      %v1121 = vunpack.c.l.b16 %v664
      %v1122 = vunpack.c.l.b16 %v666
      %v1123 = vunpack.c.l.b16 %v668
      %v1124 = vunpack.c.l.b16 %v670
      %v1125 = vunpack.c.l.b16 %v672
      %v1126 = vpack.c.b16 %v1119, %v1118
      %v1127 = vpack.c.b16 %v1121, %v1120
      %v1128 = vpack.c.b16 %v1123, %v1122
      %v1129 = vpack.c.b16 %v1125, %v1124
      %v1131 = vunpack.c.l.b16 %v1109
      %v1132 = vpack.c.b16 %v1131, %v1131
      %v1133 = vrot.slane %v1132, 2
      %v1135 = vsel %vm711, %v1126, 0
      %v1138 = vsel %vm711, %v1127, 0
      %v1141 = vsel %vm711, %v1128, 0
      %v1144 = vsel %vm711, %v1129, 0
      %v1147 = vsel %vm724, %v1133, 0
      %1149 = vmatprep.subr.bf16.mxu0 0
      %1150 = vmatpush1.bf16.msra.mxu0 0
      %1151 = vmatprep.subr.bf16.mxu0 0
      %1152 = vmatpush1.bf16.msra.mxu0 0
      %1153 = vmatprep.subr.bf16.mxu0 0
      %1154 = vmatpush1.bf16.msra.mxu0 0
      %1155 = vmatprep.subr.bf16.mxu0 0
      %1156 = vmatpush1.bf16.msra.mxu0 0
      %1157 = vmatprep.subr.bf16.mxu0 0
      %1158 = vmatpush1.bf16.msra.mxu0 0
      %1159 = vmatprep.subr.bf16.mxu0 0
      %1160 = vmatpush1.bf16.msra.mxu0 0
      %1161 = vmatprep.subr.bf16.mxu0 0
      %1162 = vmatpush1.bf16.msra.mxu0 0
      %1163 = vmatprep.subr.bf16.mxu0 0
      %1164 = vmatpush1.bf16.msra.mxu0 %v1147
      %1165 = vmatprep.subr.bf16.mxu0 0
      %1166 = vmatpush2.bf16.msra.mxu0 0
      %1167 = vmatprep.subr.bf16.mxu0 0
      %1168 = vmatpush2.bf16.msra.mxu0 0
      %1169 = vmatprep.subr.bf16.mxu0 0
      %1170 = vmatpush2.bf16.msra.mxu0 0
      %1171 = vmatprep.subr.bf16.mxu0 0
      %1172 = vmatpush2.bf16.msra.mxu0 0
      %1173 = vmatprep.subr.bf16.mxu0 0
      %1174 = vmatpush2.bf16.msra.mxu0 0
      %1175 = vmatprep.subr.bf16.mxu0 0
      %1176 = vmatpush2.bf16.msra.mxu0 0
      %1177 = vmatprep.subr.bf16.mxu0 0
      %1178 = vmatpush2.bf16.msra.mxu0 0
      %1179 = vmatprep.subr.bf16.mxu0 0
      %1180 = vmatpush2.bf16.msra.mxu0 0
      %1181 = vmatprep.mubr.bf16.mxu0 0
      %1182 = vmatmul.mubr.bf16.gmra.mxu0 %v1135
      %v1183 = vpop.f32.mrf.mxu0
      %v1184 = vadd.f32 0.0, %v1183
      %v1185 = vpop.f32.mrf.mxu0
      %v1186 = vpop.f32.mrf.mxu0
      %v1187 = vadd.f32 0.0, %v1186
      %v1188 = vpop.f32.mrf.mxu0
      %1189 = vmatprep.mubr.bf16.mxu0 0
      %1190 = vmatmul.mubr.bf16.gmra.mxu0 %v1138
      %v1191 = vpop.f32.mrf.mxu0
      %v1192 = vadd.f32 0.0, %v1191
      %v1193 = vpop.f32.mrf.mxu0
      %v1194 = vpop.f32.mrf.mxu0
      %v1195 = vadd.f32 0.0, %v1194
      %v1196 = vpop.f32.mrf.mxu0
      %1197 = vmatprep.mubr.bf16.mxu0 0
      %1198 = vmatmul.mubr.bf16.gmra.mxu0 %v1141
      %v1199 = vpop.f32.mrf.mxu0
      %v1200 = vadd.f32 0.0, %v1199
      %v1201 = vpop.f32.mrf.mxu0
      %v1202 = vpop.f32.mrf.mxu0
      %v1203 = vadd.f32 0.0, %v1202
      %v1204 = vpop.f32.mrf.mxu0
      %1205 = vmatprep.mubr.bf16.mxu0 0
      %1206 = vmatmul.mubr.bf16.gmra.mxu0 %v1144
      %v1207 = vpop.f32.mrf.mxu0
      %v1208 = vadd.f32 0.0, %v1207
      %v1209 = vpop.f32.mrf.mxu0
      %v1210 = vpop.f32.mrf.mxu0
      %v1211 = vadd.f32 0.0, %v1210
      %v1212 = vpop.f32.mrf.mxu0
      %1213 = vdwg.mxu0
      %v1214 = vadd.f32 %v1101, %v1184
      %v1215 = vadd.f32 %v1102, %v1187
      %v1216 = vadd.f32 %v1103, %v1192
      %v1217 = vadd.f32 %v1104, %v1195
      %v1218 = vadd.f32 %v1105, %v1200
      %v1219 = vadd.f32 %v1106, %v1203
      %v1220 = vadd.f32 %v1107, %v1208
      %v1221 = vadd.f32 %v1108, %v1211
      %v1222 = vld [vmem:[%s6 + $0x8] sm:$0x3]
      %v1231 = vunpack.c.l.b16 %v674
      %v1232 = vunpack.c.l.b16 %v675
      %v1233 = vunpack.c.l.b16 %v676
      %v1234 = vunpack.c.l.b16 %v677
      %v1235 = vunpack.c.l.b16 %v678
      %v1236 = vunpack.c.l.b16 %v679
      %v1237 = vunpack.c.l.b16 %v680
      %v1238 = vunpack.c.l.b16 %v681
      %v1239 = vpack.c.b16 %v1232, %v1231
      %v1240 = vpack.c.b16 %v1234, %v1233
      %v1241 = vpack.c.b16 %v1236, %v1235
      %v1242 = vpack.c.b16 %v1238, %v1237
      %v1244 = vsel %vm711, %v1239, 0
      %v1247 = vsel %vm711, %v1240, 0
      %v1250 = vsel %vm711, %v1241, 0
      %v1253 = vsel %vm711, %v1242, 0
      %v1256 = vsel %vm724, %v1222, 0
      %1258 = vmatprep.subr.bf16.mxu0 0
      %1259 = vmatpush1.bf16.msra.mxu0 0
      %1260 = vmatprep.subr.bf16.mxu0 0
      %1261 = vmatpush1.bf16.msra.mxu0 0
      %1262 = vmatprep.subr.bf16.mxu0 0
      %1263 = vmatpush1.bf16.msra.mxu0 0
      %1264 = vmatprep.subr.bf16.mxu0 0
      %1265 = vmatpush1.bf16.msra.mxu0 0
      %1266 = vmatprep.subr.bf16.mxu0 0
      %1267 = vmatpush1.bf16.msra.mxu0 0
      %1268 = vmatprep.subr.bf16.mxu0 0
      %1269 = vmatpush1.bf16.msra.mxu0 0
      %1270 = vmatprep.subr.bf16.mxu0 0
      %1271 = vmatpush1.bf16.msra.mxu0 0
      %1272 = vmatprep.subr.bf16.mxu0 0
      %1273 = vmatpush1.bf16.msra.mxu0 %v1256
      %1274 = vmatprep.subr.bf16.mxu0 0
      %1275 = vmatpush2.bf16.msra.mxu0 0
      %1276 = vmatprep.subr.bf16.mxu0 0
      %1277 = vmatpush2.bf16.msra.mxu0 0
      %1278 = vmatprep.subr.bf16.mxu0 0
      %1279 = vmatpush2.bf16.msra.mxu0 0
      %1280 = vmatprep.subr.bf16.mxu0 0
      %1281 = vmatpush2.bf16.msra.mxu0 0
      %1282 = vmatprep.subr.bf16.mxu0 0
      %1283 = vmatpush2.bf16.msra.mxu0 0
      %1284 = vmatprep.subr.bf16.mxu0 0
      %1285 = vmatpush2.bf16.msra.mxu0 0
      %1286 = vmatprep.subr.bf16.mxu0 0
      %1287 = vmatpush2.bf16.msra.mxu0 0
      %1288 = vmatprep.subr.bf16.mxu0 0
      %1289 = vmatpush2.bf16.msra.mxu0 0
      %1290 = vmatprep.mubr.bf16.mxu0 0
      %1291 = vmatmul.mubr.bf16.gmra.mxu0 %v1244
      %v1292 = vpop.f32.mrf.mxu0
      %v1293 = vadd.f32 0.0, %v1292
      %v1294 = vpop.f32.mrf.mxu0
      %v1295 = vpop.f32.mrf.mxu0
      %v1296 = vadd.f32 0.0, %v1295
      %v1297 = vpop.f32.mrf.mxu0
      %1298 = vmatprep.mubr.bf16.mxu0 0
      %1299 = vmatmul.mubr.bf16.gmra.mxu0 %v1247
      %v1300 = vpop.f32.mrf.mxu0
      %v1301 = vadd.f32 0.0, %v1300
      %v1302 = vpop.f32.mrf.mxu0
      %v1303 = vpop.f32.mrf.mxu0
      %v1304 = vadd.f32 0.0, %v1303
      %v1305 = vpop.f32.mrf.mxu0
      %1306 = vmatprep.mubr.bf16.mxu0 0
      %1307 = vmatmul.mubr.bf16.gmra.mxu0 %v1250
      %v1308 = vpop.f32.mrf.mxu0
      %v1309 = vadd.f32 0.0, %v1308
      %v1310 = vpop.f32.mrf.mxu0
      %v1311 = vpop.f32.mrf.mxu0
      %v1312 = vadd.f32 0.0, %v1311
      %v1313 = vpop.f32.mrf.mxu0
      %1314 = vmatprep.mubr.bf16.mxu0 0
      %1315 = vmatmul.mubr.bf16.gmra.mxu0 %v1253
      %v1316 = vpop.f32.mrf.mxu0
      %v1317 = vadd.f32 0.0, %v1316
      %v1318 = vpop.f32.mrf.mxu0
      %v1319 = vpop.f32.mrf.mxu0
      %v1320 = vadd.f32 0.0, %v1319
      %v1321 = vpop.f32.mrf.mxu0
      %1322 = vdwg.mxu0
      %v1323 = vadd.f32 %v1214, %v1293
      %v1324 = vadd.f32 %v1215, %v1296
      %v1325 = vadd.f32 %v1216, %v1301
      %v1326 = vadd.f32 %v1217, %v1304
      %v1327 = vadd.f32 %v1218, %v1309
      %v1328 = vadd.f32 %v1219, %v1312
      %v1329 = vadd.f32 %v1220, %v1317
      %v1330 = vadd.f32 %v1221, %v1320
      %v1332 = vshrl.u32 %v658, 16
      %v1334 = vrot.slane %v1332, 4
      %v1335 = vshll.u32 %v658, 16
      %v1337 = vrot.slane %v1335, 5
      %v1338 = vor.u32 %v1334, %v1337
      %v1339 = vrot.slane %v1338, 4
      %v1341 = vshll.u32 %v659, 16
      %v1343 = vrot.slane %v1341, 5
      %v1344 = vsel %vm895, %v1339, %v1343
      %v1346 = vshrl.u32 %v660, 16
      %v1348 = vrot.slane %v1346, 4
      %v1349 = vshll.u32 %v660, 16
      %v1351 = vrot.slane %v1349, 5
      %v1352 = vor.u32 %v1348, %v1351
      %v1353 = vrot.slane %v1352, 4
      %v1355 = vshll.u32 %v661, 16
      %v1357 = vrot.slane %v1355, 5
      %v1358 = vsel %vm895, %v1353, %v1357
      %v1360 = vshrl.u32 %v662, 16
      %v1362 = vrot.slane %v1360, 4
      %v1363 = vshll.u32 %v662, 16
      %v1365 = vrot.slane %v1363, 5
      %v1366 = vor.u32 %v1362, %v1365
      %v1367 = vrot.slane %v1366, 4
      %v1369 = vshll.u32 %v663, 16
      %v1371 = vrot.slane %v1369, 5
      %v1372 = vsel %vm895, %v1367, %v1371
      %v1374 = vshrl.u32 %v664, 16
      %v1376 = vrot.slane %v1374, 4
      %v1377 = vshll.u32 %v664, 16
      %v1379 = vrot.slane %v1377, 5
      %v1380 = vor.u32 %v1376, %v1379
      %v1381 = vrot.slane %v1380, 4
      %v1383 = vshll.u32 %v665, 16
      %v1385 = vrot.slane %v1383, 5
      %v1386 = vsel %vm895, %v1381, %v1385
      %v1388 = vshrl.u32 %v666, 16
      %v1390 = vrot.slane %v1388, 4
      %v1391 = vshll.u32 %v666, 16
      %v1393 = vrot.slane %v1391, 5
      %v1394 = vor.u32 %v1390, %v1393
      %v1395 = vrot.slane %v1394, 4
      %v1397 = vshll.u32 %v667, 16
      %v1399 = vrot.slane %v1397, 5
      %v1400 = vsel %vm895, %v1395, %v1399
      %v1402 = vshrl.u32 %v668, 16
      %v1404 = vrot.slane %v1402, 4
      %v1405 = vshll.u32 %v668, 16
      %v1407 = vrot.slane %v1405, 5
      %v1408 = vor.u32 %v1404, %v1407
      %v1409 = vrot.slane %v1408, 4
      %v1411 = vshll.u32 %v669, 16
      %v1413 = vrot.slane %v1411, 5
      %v1414 = vsel %vm895, %v1409, %v1413
      %v1416 = vshrl.u32 %v670, 16
      %v1418 = vrot.slane %v1416, 4
      %v1419 = vshll.u32 %v670, 16
      %v1421 = vrot.slane %v1419, 5
      %v1422 = vor.u32 %v1418, %v1421
      %v1423 = vrot.slane %v1422, 4
      %v1425 = vshll.u32 %v671, 16
      %v1427 = vrot.slane %v1425, 5
      %v1428 = vsel %vm895, %v1423, %v1427
      %v1430 = vshrl.u32 %v672, 16
      %v1432 = vrot.slane %v1430, 4
      %v1433 = vshll.u32 %v672, 16
      %v1435 = vrot.slane %v1433, 5
      %v1436 = vor.u32 %v1432, %v1435
      %v1437 = vrot.slane %v1436, 4
      %v1439 = vshll.u32 %v673, 16
      %v1441 = vrot.slane %v1439, 5
      %v1442 = vsel %vm895, %v1437, %v1441
      %v1443 = vld [vmem:[%s6 + $0x8] sm:$0xc]
      %v1444 = vunpack.c.l.b16 %v1344
      %v1445 = vunpack.c.l.b16 %v1358
      %v1446 = vunpack.c.l.b16 %v1372
      %v1447 = vunpack.c.l.b16 %v1386
      %v1448 = vunpack.c.l.b16 %v1400
      %v1449 = vunpack.c.l.b16 %v1414
      %v1450 = vunpack.c.l.b16 %v1428
      %v1451 = vunpack.c.l.b16 %v1442
      %v1452 = vpack.c.b16 %v1445, %v1444
      %v1453 = vpack.c.b16 %v1447, %v1446
      %v1454 = vpack.c.b16 %v1449, %v1448
      %v1455 = vpack.c.b16 %v1451, %v1450
      %v1457 = vunpack.c.l.b16 %v1443
      %v1458 = vpack.c.b16 %v1457, %v1457
      %v1459 = vrot.slane %v1458, 2
      %v1461 = vsel %vm711, %v1452, 0
      %v1464 = vsel %vm711, %v1453, 0
      %v1467 = vsel %vm711, %v1454, 0
      %v1470 = vsel %vm711, %v1455, 0
      %v1473 = vsel %vm724, %v1459, 0
      %1475 = vmatprep.subr.bf16.mxu0 0
      %1476 = vmatpush1.bf16.msra.mxu0 0
      %1477 = vmatprep.subr.bf16.mxu0 0
      %1478 = vmatpush1.bf16.msra.mxu0 0
      %1479 = vmatprep.subr.bf16.mxu0 0
      %1480 = vmatpush1.bf16.msra.mxu0 0
      %1481 = vmatprep.subr.bf16.mxu0 0
      %1482 = vmatpush1.bf16.msra.mxu0 0
      %1483 = vmatprep.subr.bf16.mxu0 0
      %1484 = vmatpush1.bf16.msra.mxu0 0
      %1485 = vmatprep.subr.bf16.mxu0 0
      %1486 = vmatpush1.bf16.msra.mxu0 0
      %1487 = vmatprep.subr.bf16.mxu0 0
      %1488 = vmatpush1.bf16.msra.mxu0 0
      %1489 = vmatprep.subr.bf16.mxu0 0
      %1490 = vmatpush1.bf16.msra.mxu0 %v1473
      %1491 = vmatprep.subr.bf16.mxu0 0
      %1492 = vmatpush2.bf16.msra.mxu0 0
      %1493 = vmatprep.subr.bf16.mxu0 0
      %1494 = vmatpush2.bf16.msra.mxu0 0
      %1495 = vmatprep.subr.bf16.mxu0 0
      %1496 = vmatpush2.bf16.msra.mxu0 0
      %1497 = vmatprep.subr.bf16.mxu0 0
      %1498 = vmatpush2.bf16.msra.mxu0 0
      %1499 = vmatprep.subr.bf16.mxu0 0
      %1500 = vmatpush2.bf16.msra.mxu0 0
      %1501 = vmatprep.subr.bf16.mxu0 0
      %1502 = vmatpush2.bf16.msra.mxu0 0
      %1503 = vmatprep.subr.bf16.mxu0 0
      %1504 = vmatpush2.bf16.msra.mxu0 0
      %1505 = vmatprep.subr.bf16.mxu0 0
      %1506 = vmatpush2.bf16.msra.mxu0 0
      %1507 = vmatprep.mubr.bf16.mxu0 0
      %1508 = vmatmul.mubr.bf16.gmra.mxu0 %v1461
      %v1509 = vpop.f32.mrf.mxu0
      %v1510 = vadd.f32 0.0, %v1509
      %v1511 = vpop.f32.mrf.mxu0
      %v1512 = vpop.f32.mrf.mxu0
      %v1513 = vadd.f32 0.0, %v1512
      %v1514 = vpop.f32.mrf.mxu0
      %1515 = vmatprep.mubr.bf16.mxu0 0
      %1516 = vmatmul.mubr.bf16.gmra.mxu0 %v1464
      %v1517 = vpop.f32.mrf.mxu0
      %v1518 = vadd.f32 0.0, %v1517
      %v1519 = vpop.f32.mrf.mxu0
      %v1520 = vpop.f32.mrf.mxu0
      %v1521 = vadd.f32 0.0, %v1520
      %v1522 = vpop.f32.mrf.mxu0
      %1523 = vmatprep.mubr.bf16.mxu0 0
      %1524 = vmatmul.mubr.bf16.gmra.mxu0 %v1467
      %v1525 = vpop.f32.mrf.mxu0
      %v1526 = vadd.f32 0.0, %v1525
      %v1527 = vpop.f32.mrf.mxu0
      %v1528 = vpop.f32.mrf.mxu0
      %v1529 = vadd.f32 0.0, %v1528
      %v1530 = vpop.f32.mrf.mxu0
      %1531 = vmatprep.mubr.bf16.mxu0 0
      %1532 = vmatmul.mubr.bf16.gmra.mxu0 %v1470
      %v1533 = vpop.f32.mrf.mxu0
      %v1534 = vadd.f32 0.0, %v1533
      %v1535 = vpop.f32.mrf.mxu0
      %v1536 = vpop.f32.mrf.mxu0
      %v1537 = vadd.f32 0.0, %v1536
      %v1538 = vpop.f32.mrf.mxu0
      %1539 = vdwg.mxu0
      %v1540 = vadd.f32 %v1323, %v1510
      %v1541 = vadd.f32 %v1324, %v1513
      %v1542 = vadd.f32 %v1325, %v1518
      %v1543 = vadd.f32 %v1326, %v1521
      %v1544 = vadd.f32 %v1327, %v1526
      %v1545 = vadd.f32 %v1328, %v1529
      %v1546 = vadd.f32 %v1329, %v1534
      %v1547 = vadd.f32 %v1330, %v1537
      %v1548 = vld [vmem:[%s6 + $0xc] sm:$0x3]
      %v1550 = vunpack.c.l.b16 %v682
      %v1551 = vpack.c.b16 %v803, %v802
      %v1552 = vpack.c.b16 %v805, %v804
      %v1553 = vpack.c.b16 %v807, %v806
      %v1554 = vpack.c.b16 %v1550, %v808
      %v1556 = vsel %vm711, %v1551, 0
      %v1559 = vsel %vm711, %v1552, 0
      %v1562 = vsel %vm711, %v1553, 0
      %v1565 = vsel %vm711, %v1554, 0
      %v1568 = vsel %vm724, %v1548, 0
      %1570 = vmatprep.subr.bf16.mxu0 0
      %1571 = vmatpush1.bf16.msra.mxu0 0
      %1572 = vmatprep.subr.bf16.mxu0 0
      %1573 = vmatpush1.bf16.msra.mxu0 0
      %1574 = vmatprep.subr.bf16.mxu0 0
      %1575 = vmatpush1.bf16.msra.mxu0 0
      %1576 = vmatprep.subr.bf16.mxu0 0
      %1577 = vmatpush1.bf16.msra.mxu0 0
      %1578 = vmatprep.subr.bf16.mxu0 0
      %1579 = vmatpush1.bf16.msra.mxu0 0
      %1580 = vmatprep.subr.bf16.mxu0 0
      %1581 = vmatpush1.bf16.msra.mxu0 0
      %1582 = vmatprep.subr.bf16.mxu0 0
      %1583 = vmatpush1.bf16.msra.mxu0 0
      %1584 = vmatprep.subr.bf16.mxu0 0
      %1585 = vmatpush1.bf16.msra.mxu0 %v1568
      %1586 = vmatprep.subr.bf16.mxu0 0
      %1587 = vmatpush2.bf16.msra.mxu0 0
      %1588 = vmatprep.subr.bf16.mxu0 0
      %1589 = vmatpush2.bf16.msra.mxu0 0
      %1590 = vmatprep.subr.bf16.mxu0 0
      %1591 = vmatpush2.bf16.msra.mxu0 0
      %1592 = vmatprep.subr.bf16.mxu0 0
      %1593 = vmatpush2.bf16.msra.mxu0 0
      %1594 = vmatprep.subr.bf16.mxu0 0
      %1595 = vmatpush2.bf16.msra.mxu0 0
      %1596 = vmatprep.subr.bf16.mxu0 0
      %1597 = vmatpush2.bf16.msra.mxu0 0
      %1598 = vmatprep.subr.bf16.mxu0 0
      %1599 = vmatpush2.bf16.msra.mxu0 0
      %1600 = vmatprep.subr.bf16.mxu0 0
      %1601 = vmatpush2.bf16.msra.mxu0 0
      %1602 = vmatprep.mubr.bf16.mxu0 0
      %1603 = vmatmul.mubr.bf16.gmra.mxu0 %v1556
      %v1604 = vpop.f32.mrf.mxu0
      %v1605 = vadd.f32 0.0, %v1604
      %v1606 = vpop.f32.mrf.mxu0
      %v1607 = vpop.f32.mrf.mxu0
      %v1608 = vadd.f32 0.0, %v1607
      %v1609 = vpop.f32.mrf.mxu0
      %1610 = vmatprep.mubr.bf16.mxu0 0
      %1611 = vmatmul.mubr.bf16.gmra.mxu0 %v1559
      %v1612 = vpop.f32.mrf.mxu0
      %v1613 = vadd.f32 0.0, %v1612
      %v1614 = vpop.f32.mrf.mxu0
      %v1615 = vpop.f32.mrf.mxu0
      %v1616 = vadd.f32 0.0, %v1615
      %v1617 = vpop.f32.mrf.mxu0
      %1618 = vmatprep.mubr.bf16.mxu0 0
      %1619 = vmatmul.mubr.bf16.gmra.mxu0 %v1562
      %v1620 = vpop.f32.mrf.mxu0
      %v1621 = vadd.f32 0.0, %v1620
      %v1622 = vpop.f32.mrf.mxu0
      %v1623 = vpop.f32.mrf.mxu0
      %v1624 = vadd.f32 0.0, %v1623
      %v1625 = vpop.f32.mrf.mxu0
      %1626 = vmatprep.mubr.bf16.mxu0 0
      %1627 = vmatmul.mubr.bf16.gmra.mxu0 %v1565
      %v1628 = vpop.f32.mrf.mxu0
      %v1629 = vadd.f32 0.0, %v1628
      %v1630 = vpop.f32.mrf.mxu0
      %v1631 = vpop.f32.mrf.mxu0
      %v1632 = vadd.f32 0.0, %v1631
      %v1633 = vpop.f32.mrf.mxu0
      %1634 = vdwg.mxu0
      %v1635 = vadd.f32 %v1540, %v1605
      %v1636 = vadd.f32 %v1541, %v1608
      %v1637 = vadd.f32 %v1542, %v1613
      %v1638 = vadd.f32 %v1543, %v1616
      %v1639 = vadd.f32 %v1544, %v1621
      %v1640 = vadd.f32 %v1545, %v1624
      %v1641 = vadd.f32 %v1546, %v1629
      %v1642 = vadd.f32 %v1547, %v1632
      %v1643 = vld [vmem:[%s6 + $0xc] sm:$0xc]
      %v1645 = vunpack.c.l.b16 %v684
      %v1646 = vpack.c.b16 %v697, %v696
      %v1647 = vpack.c.b16 %v699, %v698
      %v1648 = vpack.c.b16 %v701, %v700
      %v1649 = vpack.c.b16 %v1645, %v702
      %v1651 = vunpack.c.l.b16 %v1643
      %v1652 = vpack.c.b16 %v1651, %v1651
      %v1653 = vrot.slane %v1652, 2
      %v1655 = vsel %vm711, %v1646, 0
      %v1658 = vsel %vm711, %v1647, 0
      %v1661 = vsel %vm711, %v1648, 0
      %v1664 = vsel %vm711, %v1649, 0
      %v1667 = vsel %vm724, %v1653, 0
      %1669 = vmatprep.subr.bf16.mxu0 0
      %1670 = vmatpush1.bf16.msra.mxu0 0
      %1671 = vmatprep.subr.bf16.mxu0 0
      %1672 = vmatpush1.bf16.msra.mxu0 0
      %1673 = vmatprep.subr.bf16.mxu0 0
      %1674 = vmatpush1.bf16.msra.mxu0 0
      %1675 = vmatprep.subr.bf16.mxu0 0
      %1676 = vmatpush1.bf16.msra.mxu0 0
      %1677 = vmatprep.subr.bf16.mxu0 0
      %1678 = vmatpush1.bf16.msra.mxu0 0
      %1679 = vmatprep.subr.bf16.mxu0 0
      %1680 = vmatpush1.bf16.msra.mxu0 0
      %1681 = vmatprep.subr.bf16.mxu0 0
      %1682 = vmatpush1.bf16.msra.mxu0 0
      %1683 = vmatprep.subr.bf16.mxu0 0
      %1684 = vmatpush1.bf16.msra.mxu0 %v1667
      %1685 = vmatprep.subr.bf16.mxu0 0
      %1686 = vmatpush2.bf16.msra.mxu0 0
      %1687 = vmatprep.subr.bf16.mxu0 0
      %1688 = vmatpush2.bf16.msra.mxu0 0
      %1689 = vmatprep.subr.bf16.mxu0 0
      %1690 = vmatpush2.bf16.msra.mxu0 0
      %1691 = vmatprep.subr.bf16.mxu0 0
      %1692 = vmatpush2.bf16.msra.mxu0 0
      %1693 = vmatprep.subr.bf16.mxu0 0
      %1694 = vmatpush2.bf16.msra.mxu0 0
      %1695 = vmatprep.subr.bf16.mxu0 0
      %1696 = vmatpush2.bf16.msra.mxu0 0
      %1697 = vmatprep.subr.bf16.mxu0 0
      %1698 = vmatpush2.bf16.msra.mxu0 0
      %1699 = vmatprep.subr.bf16.mxu0 0
      %1700 = vmatpush2.bf16.msra.mxu0 0
      %1701 = vmatprep.mubr.bf16.mxu0 0
      %1702 = vmatmul.mubr.bf16.gmra.mxu0 %v1655
      %v1703 = vpop.f32.mrf.mxu0
      %v1704 = vadd.f32 0.0, %v1703
      %v1705 = vpop.f32.mrf.mxu0
      %v1706 = vpop.f32.mrf.mxu0
      %v1707 = vadd.f32 0.0, %v1706
      %v1708 = vpop.f32.mrf.mxu0
      %1709 = vmatprep.mubr.bf16.mxu0 0
      %1710 = vmatmul.mubr.bf16.gmra.mxu0 %v1658
      %v1711 = vpop.f32.mrf.mxu0
      %v1712 = vadd.f32 0.0, %v1711
      %v1713 = vpop.f32.mrf.mxu0
      %v1714 = vpop.f32.mrf.mxu0
      %v1715 = vadd.f32 0.0, %v1714
      %v1716 = vpop.f32.mrf.mxu0
      %1717 = vmatprep.mubr.bf16.mxu0 0
      %1718 = vmatmul.mubr.bf16.gmra.mxu0 %v1661
      %v1719 = vpop.f32.mrf.mxu0
      %v1720 = vadd.f32 0.0, %v1719
      %v1721 = vpop.f32.mrf.mxu0
      %v1722 = vpop.f32.mrf.mxu0
      %v1723 = vadd.f32 0.0, %v1722
      %v1724 = vpop.f32.mrf.mxu0
      %1725 = vmatprep.mubr.bf16.mxu0 0
      %1726 = vmatmul.mubr.bf16.gmra.mxu0 %v1664
      %v1727 = vpop.f32.mrf.mxu0
      %v1728 = vadd.f32 0.0, %v1727
      %v1729 = vpop.f32.mrf.mxu0
      %v1730 = vpop.f32.mrf.mxu0
      %v1731 = vadd.f32 0.0, %v1730
      %v1732 = vpop.f32.mrf.mxu0
      %1733 = vdwg.mxu0
      %v1734 = vadd.f32 %v1635, %v1704
      %v1735 = vadd.f32 %v1636, %v1707
      %v1736 = vadd.f32 %v1637, %v1712
      %v1737 = vadd.f32 %v1638, %v1715
      %v1738 = vadd.f32 %v1639, %v1720
      %v1739 = vadd.f32 %v1640, %v1723
      %v1740 = vadd.f32 %v1641, %v1728
      %v1741 = vadd.f32 %v1642, %v1731
      %v1743 = vshrl.u32 %v682, 16
      %v1745 = vrot.slane %v1743, 4
      %v1746 = vshll.u32 %v682, 16
      %v1748 = vrot.slane %v1746, 5
      %v1749 = vor.u32 %v1745, %v1748
      %v1750 = vrot.slane %v1749, 4
      %v1752 = vshll.u32 %v683, 16
      %v1754 = vrot.slane %v1752, 5
      %v1755 = vsel %vm895, %v1750, %v1754
      %v1756 = vld [vmem:[%s6 + $0x10] sm:$0x3]
      %v1757 = vunpack.c.l.b16 %v1755
      %v1758 = vpack.c.b16 %v1011, %v1010
      %v1759 = vpack.c.b16 %v1013, %v1012
      %v1760 = vpack.c.b16 %v1015, %v1014
      %v1761 = vpack.c.b16 %v1757, %v1016
      %v1763 = vsel %vm711, %v1758, 0
      %v1766 = vsel %vm711, %v1759, 0
      %v1769 = vsel %vm711, %v1760, 0
      %v1772 = vsel %vm711, %v1761, 0
      %v1775 = vsel %vm724, %v1756, 0
      %1777 = vmatprep.subr.bf16.mxu0 0
      %1778 = vmatpush1.bf16.msra.mxu0 0
      %1779 = vmatprep.subr.bf16.mxu0 0
      %1780 = vmatpush1.bf16.msra.mxu0 0
      %1781 = vmatprep.subr.bf16.mxu0 0
      %1782 = vmatpush1.bf16.msra.mxu0 0
      %1783 = vmatprep.subr.bf16.mxu0 0
      %1784 = vmatpush1.bf16.msra.mxu0 0
      %1785 = vmatprep.subr.bf16.mxu0 0
      %1786 = vmatpush1.bf16.msra.mxu0 0
      %1787 = vmatprep.subr.bf16.mxu0 0
      %1788 = vmatpush1.bf16.msra.mxu0 0
      %1789 = vmatprep.subr.bf16.mxu0 0
      %1790 = vmatpush1.bf16.msra.mxu0 0
      %1791 = vmatprep.subr.bf16.mxu0 0
      %1792 = vmatpush1.bf16.msra.mxu0 %v1775
      %1793 = vmatprep.subr.bf16.mxu0 0
      %1794 = vmatpush2.bf16.msra.mxu0 0
      %1795 = vmatprep.subr.bf16.mxu0 0
      %1796 = vmatpush2.bf16.msra.mxu0 0
      %1797 = vmatprep.subr.bf16.mxu0 0
      %1798 = vmatpush2.bf16.msra.mxu0 0
      %1799 = vmatprep.subr.bf16.mxu0 0
      %1800 = vmatpush2.bf16.msra.mxu0 0
      %1801 = vmatprep.subr.bf16.mxu0 0
      %1802 = vmatpush2.bf16.msra.mxu0 0
      %1803 = vmatprep.subr.bf16.mxu0 0
      %1804 = vmatpush2.bf16.msra.mxu0 0
      %1805 = vmatprep.subr.bf16.mxu0 0
      %1806 = vmatpush2.bf16.msra.mxu0 0
      %1807 = vmatprep.subr.bf16.mxu0 0
      %1808 = vmatpush2.bf16.msra.mxu0 0
      %1809 = vmatprep.mubr.bf16.mxu0 0
      %1810 = vmatmul.mubr.bf16.gmra.mxu0 %v1763
      %v1811 = vpop.f32.mrf.mxu0
      %v1812 = vadd.f32 0.0, %v1811
      %v1813 = vpop.f32.mrf.mxu0
      %v1814 = vpop.f32.mrf.mxu0
      %v1815 = vadd.f32 0.0, %v1814
      %v1816 = vpop.f32.mrf.mxu0
      %1817 = vmatprep.mubr.bf16.mxu0 0
      %1818 = vmatmul.mubr.bf16.gmra.mxu0 %v1766
      %v1819 = vpop.f32.mrf.mxu0
      %v1820 = vadd.f32 0.0, %v1819
      %v1821 = vpop.f32.mrf.mxu0
      %v1822 = vpop.f32.mrf.mxu0
      %v1823 = vadd.f32 0.0, %v1822
      %v1824 = vpop.f32.mrf.mxu0
      %1825 = vmatprep.mubr.bf16.mxu0 0
      %1826 = vmatmul.mubr.bf16.gmra.mxu0 %v1769
      %v1827 = vpop.f32.mrf.mxu0
      %v1828 = vadd.f32 0.0, %v1827
      %v1829 = vpop.f32.mrf.mxu0
      %v1830 = vpop.f32.mrf.mxu0
      %v1831 = vadd.f32 0.0, %v1830
      %v1832 = vpop.f32.mrf.mxu0
      %1833 = vmatprep.mubr.bf16.mxu0 0
      %1834 = vmatmul.mubr.bf16.gmra.mxu0 %v1772
      %v1835 = vpop.f32.mrf.mxu0
      %v1836 = vadd.f32 0.0, %v1835
      %v1837 = vpop.f32.mrf.mxu0
      %v1838 = vpop.f32.mrf.mxu0
      %v1839 = vadd.f32 0.0, %v1838
      %v1840 = vpop.f32.mrf.mxu0
      %1841 = vdwg.mxu0
      %v1842 = vadd.f32 %v1734, %v1812
      %v1843 = vadd.f32 %v1735, %v1815
      %v1844 = vadd.f32 %v1736, %v1820
      %v1845 = vadd.f32 %v1737, %v1823
      %v1846 = vadd.f32 %v1738, %v1828
      %v1847 = vadd.f32 %v1739, %v1831
      %v1848 = vadd.f32 %v1740, %v1836
      %v1849 = vadd.f32 %v1741, %v1839
      %v1850 = vld [vmem:[%s7] sm:$0x1]
      %v1852 = vlaneseq
      %v1853 = vshrl.u32 %v1852, 7
      %v1854 = vsub.s32 0, %v1853
      %v1855 = vrot.slane %v1850, %v1854
      %v1857 = vadd.f32 %v1842, %v1855
      %v1858 = vadd.f32 %v1843, %v1855
      %v1859 = vadd.f32 %v1844, %v1855
      %v1860 = vadd.f32 %v1845, %v1855
      %v1861 = vadd.f32 %v1846, %v1855
      %v1862 = vadd.f32 %v1847, %v1855
      %v1863 = vadd.f32 %v1848, %v1855
      %v1864 = vadd.f32 %v1849, %v1855
      %v1865 = vpack.c.bf16 %v1857, %v1857
      %v1866 = vpack.c.bf16 %v1858, %v1858
      %v1867 = vpack.c.bf16 %v1859, %v1859
      %v1868 = vpack.c.bf16 %v1860, %v1860
      %v1869 = vpack.c.bf16 %v1861, %v1861
      %v1870 = vpack.c.bf16 %v1862, %v1862
      %v1871 = vpack.c.bf16 %v1863, %v1863
      %v1872 = vpack.c.bf16 %v1864, %v1864
      %1873 = vst [vmem:[%s631] sm:$0xf] %v1865
      %1874 = vst [vmem:[%s631 + $0x4] sm:$0xf] %v1866
      %1875 = vst [vmem:[%s631 + $0x8] sm:$0xf] %v1867
      %1876 = vst [vmem:[%s631 + $0xc] sm:$0xf] %v1868
      %1877 = vst [vmem:[%s631 + $0x10] sm:$0xf] %v1869
      %1878 = vst [vmem:[%s631 + $0x14] sm:$0xf] %v1870
      %1879 = vst [vmem:[%s631 + $0x18] sm:$0xf] %v1871
      %1880 = vst [vmem:[%s631 + $0x1c] sm:$0xf] %v1872
      %s1881 = smul.u32 8, %s24
      %p1882 = scmp.lt.s32.totalorder %s23, 1
      %s1883 = scalar_select %p1882, %s23, 1
      %p1884 = scmp.lt.s32.totalorder %s1881, 7
      %s1885 = scalar_select %p1884, %s1881, 7
      %s1886 = smul.addr %s1883, 8
      %s1887 = sadd.s32 %s1885, %s1886
      %s1888 = smul.addr %s1887, 4
      %s1889 = scalar_lea.vmem %s8, %s1888
      // Predicated region
      $region53: #{downsample_forward.1} parent=51 // pred_check
        %p1890 = pneg %p261
      $region54: #{downsample_forward.1} parent=51 // pred_check_branch
        %1892 = sbr.rel (%p1890) target = $region56
      $region55: #{downsample_forward.1} parent=51 // pred_region
        %s1893 = smul.u32 8, %s24
      $region56: #{downsample_forward.1} parent=51 // pred_fallthru
        _
    $region52: #{downsample_forward.1} parent=5 // pred_fallthru
      _
    %p1894 = scmp.le.s32.totalorder 2, %s14
    // Predicated region
    $region57: #{downsample_forward.1} parent=5 // pred_check
      %p1895 = pneg %p1894
    $region58: #{downsample_forward.1} parent=5 // pred_check_branch
      %1897 = sbr.rel (%p1895) target = $region60
    $region59: #{downsample_forward.1} parent=5 // pred_region
      %s1898 = ssub.s32 %s14, 2
      // Predicated region
      $region61: #{downsample_forward.1} parent=59 // pred_check
        %p1899 = pneg %p267
      $region62: #{downsample_forward.1} parent=59 // pred_check_branch
        %1901 = sbr.rel (%p1899) target = $region64
      $region63: #{downsample_forward.1} parent=59 // pred_region
        %s1902 = smul.u32 8, %s26
        %p1903 = scmp.lt.s32.totalorder %s25, 1
        %s1904 = scalar_select %p1903, %s25, 1
        %p1905 = scmp.lt.s32.totalorder %s1902, 7
        %s1906 = scalar_select %p1905, %s1902, 7
        %s1907 = smul.addr %s1904, 8
        %s1908 = sadd.s32 %s1906, %s1907
        %s1909 = smul.addr %s1908, 4
        %s1910 = scalar_lea.vmem %s8, %s1909
      $region64: #{downsample_forward.1} parent=59 // pred_fallthru
        _
    $region60: #{downsample_forward.1} parent=5 // pred_fallthru
      _
  $region6: #{downsample_forward.1} parent=0 // loop_footer
    %s18 = sadd.s32 1, %s14
  $region7: #{downsample_forward.1} parent=0 // loop_footer_branch
    %13 = sbr.rel target = $region3
  $region8: #{downsample_forward.1} parent=0 // loop_exit
    _

</llo_original>
